<compile_context>
chip_gen: v6e
topology: v6e:2x2x1
jax: 0.10.0
libtpu: 0.0.40
codegen_flags: <defaults>
</compile_context>

<pallas_src>
import functools

import jax
import jax.numpy as jnp
from jax import lax
from jax.experimental import pallas as pl
from jax.experimental.pallas import tpu as pltpu


def _round_up(x, m):
    return ((x + m - 1) // m) * m


def _pick_time_block(seq_len, bp, hp, *, max_blk=64,
                     vmem_budget_bytes=40 * 1024 * 1024):
    """Largest time block whose double-buffered streams fit the VMEM budget."""
    gx_step = bp * 4 * hp * 2          # bf16 gate stream per time step
    hs_step = bp * hp * 4              # f32 hidden writeback per time step
    fixed = 2 * hp * 4 * hp * 2        # Whh (bf16, conservatively x2)
    fixed += 2 * bp * hp * 4           # final-c output block (x2)
    fixed += 2 * bp * hp * 4           # h/c scratch
    avail = vmem_budget_bytes - fixed
    per_t = 2 * (gx_step + hs_step)    # double-buffered per-step bytes
    t = avail // per_t if avail > per_t else 1
    return int(max(1, min(max_blk, t, seq_len)))


def _pick_unroll(t_blk, max_unroll=8):
    """Largest divisor of t_blk that is <= max_unroll."""
    if t_blk <= max_unroll:
        return t_blk
    u = max_unroll
    while t_blk % u:
        u -= 1
    return max(u, 1)


def _fast_sigmoid(x):
    # sigmoid(x) == 0.5 * (tanh(x/2) + 1): one transcendental instead of
    # exp + reciprocal on the serial per-step chain.
    return 0.5 * (jnp.tanh(0.5 * x) + 1.0)


# ----------------------------------------------------------------------------
# Kernel: the sequential LSTM recurrence only.
#   gx_ref : (T_BLK, Bp, 4*Hp) bf16  precomputed x @ Wih + (bih + bhh), padded
#   whh_ref: (Hp, 4*Hp)       bf16  recurrent weights (constant block)
#   hs_ref : (T_BLK, Bp, Hp)  f32   per-step hidden states (lane-dense)
#   cn_ref : (1, Bp, Hp)      f32   final cell state (constant-index block)
#   h_scr/c_scr: (Bp, Hp)     f32   state carried across grid steps
# ----------------------------------------------------------------------------
def _lstm_recurrence_kernel(gx_ref, whh_ref, hs_ref, cn_ref, h_scr, c_scr,
                            *, t_blk, hp, seq_len, unroll):
    blk = pl.program_id(0)

    @pl.when(blk == 0)
    def _():
        # hidden_state=None in the PyTorch forward -> zero-initialized state.
        h_scr[...] = jnp.zeros_like(h_scr)
        c_scr[...] = jnp.zeros_like(c_scr)

    def step(tt, carry):
        h, c = carry
        # Recurrent matmul: bf16 operands, f32 accumulation (full-rate MXU).
        rec = jnp.dot(h.astype(jnp.bfloat16), whh_ref[...],
                      preferred_element_type=jnp.float32)
        gates = gx_ref[tt].astype(jnp.float32) + rec
        i_g = _fast_sigmoid(gates[:, 0 * hp:1 * hp])
        f_g = _fast_sigmoid(gates[:, 1 * hp:2 * hp])
        g_g = jnp.tanh(gates[:, 2 * hp:3 * hp])
        o_g = _fast_sigmoid(gates[:, 3 * hp:4 * hp])
        c_new = f_g * c + i_g * g_g
        h_new = o_g * jnp.tanh(c_new)
        # Mask padded tail steps (global t >= seq_len): freeze h/c so the
        # final carry equals the state at the true last step S-1.
        valid = (blk * t_blk + tt) < seq_len
        h = jnp.where(valid, h_new, h)
        c = jnp.where(valid, c_new, c)
        hs_ref[tt] = h.astype(hs_ref.dtype)
        return (h, c)

    h, c = lax.fori_loop(0, t_blk, step, (h_scr[...], c_scr[...]),
                         unroll=unroll)

    h_scr[...] = h
    c_scr[...] = c
    # Constant-index output block: resident in VMEM, written back once at the
    # end of the grid; because padded steps are masked, this is c at step S-1.
    cn_ref[0] = c.astype(cn_ref.dtype)


# ----------------------------------------------------------------------------
# Wrapper
# ----------------------------------------------------------------------------
def noisy_lstm_forward(params, inputs, prior_samples):
    """Forward pass of _Model.

    Args:
      inputs:        (batch, seq) int32 token ids.
      prior_samples: (batch, seq, prior_sample_dim) float32.
    Returns:
      class_logits:  (batch, seq, output_dim) float32.
      (h_n, c_n):    each (1, batch, hidden_size) float32.
    """
    B, S = inputs.shape
    _, S2, P = prior_samples.shape
    if S != S2:
        raise RuntimeError(
            f"Length of input and sample sequences do not match. {S} != {S2}")

    f32 = jnp.float32
    bf16 = jnp.bfloat16
    emb_table = params["embedding"]                       # (n_emb, E)
    E = emb_table.shape[1]
    wp, bp = params["wp"], params["bp"]                   # (P, proj), (1, proj)
    wih, whh = params["wih"], params["whh"]               # (I, 4H), (H, 4H)
    bih, bhh = params["bih"], params["bhh"]               # (1, 4H)
    wo, bo = params["wo"], params["bo"]                   # (H, O), (1, O)
    H = whh.shape[0]

    # ---------------- hoisted pre-pass (big XLA matmuls, M = B*S) -----------
    embedded = jnp.take(emb_table, inputs, axis=0).astype(f32)   # (B, S, E)
    prior = prior_samples.astype(f32)                            # (B, S, P)

    # linear_projection + Identity activation.
    proj = prior @ wp + bp[0]                                    # (B, S, proj)

    # concat(emb, proj) @ Wih expressed as two summed dots (no concat), with
    # both LSTM biases folded in once.
    b_gates = (bih + bhh)[0]                                     # (4H,)
    gates_x = embedded @ wih[:E] + proj @ wih[E:] + b_gates      # (B, S, 4H)

    # --------------- padding for dense lanes / sublanes ---------------------
    Bp = _round_up(B, 8)
    Hp = _round_up(H, 128)

    T_BLK = _pick_time_block(S, Bp, Hp)
    S_pad = _round_up(S, T_BLK)
    n_blk = S_pad // T_BLK
    unroll = _pick_unroll(T_BLK)

    # Time-major; re-lay gate blocks [i|f|g|o] each to width Hp; zero-pad
    # time, batch and hidden lanes; stream in bf16.
    gx = jnp.transpose(gates_x, (1, 0, 2)).reshape(S, B, 4, H)
    gx = jnp.pad(gx, ((0, S_pad - S), (0, Bp - B), (0, 0), (0, Hp - H)))
    gx = gx.reshape(S_pad, Bp, 4 * Hp).astype(bf16)              # (S_pad,Bp,4Hp)

    whh_p = jnp.pad(whh.reshape(H, 4, H),
                    ((0, Hp - H), (0, 0), (0, Hp - H)))
    whh_p = whh_p.reshape(Hp, 4 * Hp).astype(bf16)               # (Hp, 4Hp)

    # --------------- VMEM accounting / compiler limit -----------------------
    gx_blk_bytes = T_BLK * Bp * 4 * Hp * 2
    hs_blk_bytes = T_BLK * Bp * Hp * 4
    whh_bytes = Hp * 4 * Hp * 2
    cn_bytes = Bp * Hp * 4
    scr_bytes = 2 * Bp * Hp * 4
    needed = 2 * (gx_blk_bytes + hs_blk_bytes + whh_bytes + cn_bytes) + scr_bytes
    vmem_limit = int(min(48 * 1024 * 1024,
                         max(needed + 2 * 1024 * 1024, 16 * 1024 * 1024)))

    # --------------- recurrent Pallas kernel --------------------------------
    kernel = functools.partial(_lstm_recurrence_kernel,
                               t_blk=T_BLK, hp=Hp, seq_len=S, unroll=unroll)

    grid_spec = pltpu.PrefetchScalarGridSpec(
        num_scalar_prefetch=0,
        grid=(n_blk,),
        in_specs=[
            pl.BlockSpec((T_BLK, Bp, 4 * Hp), lambda b: (b, 0, 0)),  # gates_x
            pl.BlockSpec((Hp, 4 * Hp), lambda b: (0, 0)),            # W_hh
        ],
        out_specs=[
            pl.BlockSpec((T_BLK, Bp, Hp), lambda b: (b, 0, 0)),      # hs
            pl.BlockSpec((1, Bp, Hp), lambda b: (0, 0, 0)),          # final c
        ],
        scratch_shapes=[
            pltpu.VMEM((Bp, Hp), f32),   # h carry
            pltpu.VMEM((Bp, Hp), f32),   # c carry
        ],
    )

    hs_p, cn_p = pl.pallas_call(
        kernel,
        grid_spec=grid_spec,
        out_shape=(
            jax.ShapeDtypeStruct((S_pad, Bp, Hp), f32),
            jax.ShapeDtypeStruct((1, Bp, Hp), f32),
        ),
        compiler_params=pltpu.CompilerParams(
            dimension_semantics=("arbitrary",),   # sequential recurrence
            vmem_limit_bytes=vmem_limit),
    )(gx, whh_p)

    # --------------- hoisted post-pass (classifier, M = B*S) ----------------
    hs = hs_p[:S, :B, :H]                            # (S, B, H) time-major
    h_n = hs[S - 1][None]                            # (1, B, H)
    c_n = cn_p[:, :B, :H]                            # (1, B, H)

    hs_bf = jnp.transpose(hs, (1, 0, 2))             # (B, S, H)
    class_logits = hs_bf @ wo + bo[0]                # (B, S, O) + Identity act
    return class_logits, (h_n, c_n)


# ----------------------------------------------------------------------------
# Pure-JAX reference (semantic sanity check, f32)
# ----------------------------------------------------------------------------
def reference_forward(params, inputs, prior_samples):
    emb = jnp.take(params["embedding"], inputs, axis=0)                    # (B,S,E)
    proj = prior_samples @ params["wp"] + params["bp"][0]                  # (B,S,proj)
    x = jnp.concatenate([emb, proj], axis=-1)                              # (B,S,I)
    B, S, _ = x.shape
    H = params["whh"].shape[0]
    h = jnp.zeros((B, H), jnp.float32)
    c = jnp.zeros((B, H), jnp.float32)

    def step(carry, xt):
        h, c = carry
        gates = (xt @ params["wih"] + h @ params["whh"]
                 + params["bih"][0] + params["bhh"][0])
        i = jax.nn.sigmoid(gates[:, 0 * H:1 * H])
        f = jax.nn.sigmoid(gates[:, 1 * H:2 * H])
        g = jnp.tanh(gates[:, 2 * H:3 * H])
        o = jax.nn.sigmoid(gates[:, 3 * H:4 * H])
        c = f * c + i * g
        h = o * jnp.tanh(c)
        return (h, c), h

    (h, c), hs = jax.lax.scan(step, (h, c), jnp.transpose(x, (1, 0, 2)))
    hs = jnp.transpose(hs, (1, 0, 2))                                      # (B,S,H)
    logits = hs @ params["wo"] + params["bo"][0]
    return logits, (h[None], c[None])


# ----------------------------------------------------------------------------
# Deterministic parameter init (shapes implied by _Model.__init__)
# ----------------------------------------------------------------------------
def init_params(key, *, n_embeddings, embedding_dim, prior_dim, proj_dim,
                hidden_size, output_dim):
    lstm_input_dim = embedding_dim + proj_dim
    ks = jax.random.split(key, 9)
    u = lambda k, shape, s: jax.random.uniform(k, shape, jnp.float32, -s, s)

    emb = jax.random.normal(ks[0], (n_embeddings, embedding_dim), jnp.float32)
    emb = emb.at[0].set(0.0)                       # padding_token_index = 0

    sp = 1.0 / jnp.sqrt(prior_dim)
    sh = 1.0 / jnp.sqrt(hidden_size)
    return {
        "embedding": emb,
        # nn.Linear(prior_dim, proj_dim): weight (proj, prior) -> stored transposed.
        "wp": u(ks[1], (prior_dim, proj_dim), sp),
        "bp": u(ks[2], (1, proj_dim), sp),
        # nn.LSTM weights: W_ih (4H, I), W_hh (4H, H) -> stored transposed.
        "wih": u(ks[3], (lstm_input_dim, 4 * hidden_size), sh),
        "whh": u(ks[4], (hidden_size, 4 * hidden_size), sh),
        "bih": u(ks[5], (1, 4 * hidden_size), sh),
        "bhh": u(ks[6], (1, 4 * hidden_size), sh),
        # nn.Linear(H, output_dim): weight (O, H) -> stored transposed.
        "wo": u(ks[7], (hidden_size, output_dim), sh),
        "bo": u(ks[8], (1, output_dim), sh),
    }


if __name__ == "__main__":
    # Small deterministic example.
    B, S = 2, 8
    N_EMB, E = 20, 16
    P, PROJ = 8, 16          # lstm_input_dim = E + PROJ = 32
    H, O = 32, 10

    key = jax.random.PRNGKey(0)
    k_par, k_in, k_pr = jax.random.split(key, 3)

    params = init_params(k_par, n_embeddings=N_EMB, embedding_dim=E,
                         prior_dim=P, proj_dim=PROJ,
                         hidden_size=H, output_dim=O)

    inputs = jax.random.randint(k_in, (B, S), 0, N_EMB, dtype=jnp.int32)
    prior_samples = jax.random.normal(k_pr, (B, S, P), jnp.float32)

    logits, (h_n, c_n) = noisy_lstm_forward(params, inputs, prior_samples)
    jax.block_until_ready((logits, h_n, c_n))

    ref_logits, (ref_h, ref_c) = reference_forward(params, inputs, prior_samples)
    # bf16 gate stream / bf16 recurrent matmul -> compare with loose tolerance.
    assert jnp.allclose(logits, ref_logits, rtol=5e-2, atol=5e-2)
    assert jnp.allclose(h_n, ref_h, rtol=5e-2, atol=5e-2)
    assert jnp.allclose(c_n, ref_c, rtol=5e-2, atol=5e-2)

    print("KERNEL_OK")
</pallas_src>

<mosaic_0001>
module attributes {stable_mosaic.version = 11 : i64} {
  func.func @_lstm_recurrence_kernel(%arg0: i32, %arg1: memref<8x8x512xbf16, #tpu.memory_space<vmem>>, %arg2: memref<128x512xbf16, #tpu.memory_space<vmem>>, %arg3: memref<8x8x128xf32, #tpu.memory_space<vmem>>, %arg4: memref<1x8x128xf32, #tpu.memory_space<vmem>>, %arg5: memref<8x128xf32, #tpu.memory_space<vmem>>, %arg6: memref<8x128xf32, #tpu.memory_space<vmem>>) attributes {dimension_semantics = [#tpu.dimension_semantics<arbitrary>], iteration_bounds = array<i64: 1>, scalar_prefetch = 0 : i64, scratch_operands = 2 : i64, tpu.core_type = #tpu.core_type<tc>, window_params = [{transform_indices = @transform_0, window_bounds = array<i64: 8, 8, 512>}, {pipeline_mode = #tpu.pipeline_mode<synchronous>, transform_indices = @transform_1, window_bounds = array<i64: 128, 512>}, {transform_indices = @transform_2, window_bounds = array<i64: 8, 8, 128>}, {pipeline_mode = #tpu.pipeline_mode<synchronous>, transform_indices = @transform_3, window_bounds = array<i64: 1, 8, 128>}]} {
    %c0_i32 = arith.constant 0 : i32
    %0 = arith.cmpi eq, %arg0, %c0_i32 : i32
    %1 = arith.extui %0 : i1 to i32
    %c0_i32_0 = arith.constant 0 : i32
    %2 = arith.cmpi ne, %1, %c0_i32_0 : i32
    scf.if %2 {
      %cst_155 = arith.constant 0.000000e+00 : f32
      %394 = vector.broadcast %cst_155 : f32 to vector<8x128xf32>
      %c0_156 = arith.constant 0 : index
      %c0_157 = arith.constant 0 : index
      %395 = vector.load %arg5[%c0_156, %c0_157] : memref<8x128xf32, #tpu.memory_space<vmem>>, vector<8x128xf32>
      tpu.vector_store %arg5[%c0_156, %c0_157], %394 {strides = array<i32>} : memref<8x128xf32, #tpu.memory_space<vmem>>, vector<8x128xf32>,
      %cst_158 = arith.constant 0.000000e+00 : f32
      %396 = vector.broadcast %cst_158 : f32 to vector<8x128xf32>
      %c0_159 = arith.constant 0 : index
      %c0_160 = arith.constant 0 : index
      %397 = vector.load %arg6[%c0_159, %c0_160] : memref<8x128xf32, #tpu.memory_space<vmem>>, vector<8x128xf32>
      tpu.vector_store %arg6[%c0_159, %c0_160], %396 {strides = array<i32>} : memref<8x128xf32, #tpu.memory_space<vmem>>, vector<8x128xf32>,
    } else {
    }
    %c0 = arith.constant 0 : index
    %c0_1 = arith.constant 0 : index
    %3 = vector.load %arg5[%c0, %c0_1] : memref<8x128xf32, #tpu.memory_space<vmem>>, vector<8x128xf32>
    %c0_2 = arith.constant 0 : index
    %c0_3 = arith.constant 0 : index
    %4 = vector.load %arg6[%c0_2, %c0_3] : memref<8x128xf32, #tpu.memory_space<vmem>>, vector<8x128xf32>
    %c0_i32_4 = arith.constant 0 : i32
    %5 = arith.truncf %3 : vector<8x128xf32> to vector<8x128xbf16>
    %c0_5 = arith.constant 0 : index
    %c0_6 = arith.constant 0 : index
    %6 = vector.load %arg2[%c0_5, %c0_6] : memref<128x512xbf16, #tpu.memory_space<vmem>>, vector<128x512xbf16>
    %cst = arith.constant dense<0.000000e+00> : vector<8x512xf32>
    %7 = tpu.matmul %5, %6, %cst {dimension_numbers = #tpu.dot_dimension_numbers<[1], [0], [0], [1], [0, 0, 1, 1], [], []>} : vector<8x128xbf16>, vector<128x512xbf16>, vector<8x512xf32> -> vector<8x512xf32>
    %8 = arith.index_cast %c0_i32_4 : i32 to index
    %c0_7 = arith.constant 0 : index
    %c0_8 = arith.constant 0 : index
    %9 = vector.load %arg1[%8, %c0_7, %c0_8] : memref<8x8x512xbf16, #tpu.memory_space<vmem>>, vector<1x8x512xbf16>
    %10 = vector.shape_cast %9 : vector<1x8x512xbf16> to vector<8x512xbf16>
    %11 = arith.extf %10 : vector<8x512xbf16> to vector<8x512xf32>
    %12 = arith.addf %11, %7 : vector<8x512xf32>
    %13 = vector.extract_strided_slice %12 {offsets = [0, 0], sizes = [8, 128], strides = [1, 1]} : vector<8x512xf32> to vector<8x128xf32>
    %cst_9 = arith.constant 5.000000e-01 : f32
    %14 = vector.broadcast %cst_9 : f32 to vector<8x128xf32>
    %15 = arith.mulf %14, %13 : vector<8x128xf32>
    %16 = math.tanh %15 : vector<8x128xf32>
    %cst_10 = arith.constant 1.000000e+00 : f32
    %17 = vector.broadcast %cst_10 : f32 to vector<8x128xf32>
    %18 = arith.addf %16, %17 : vector<8x128xf32>
    %cst_11 = arith.constant 5.000000e-01 : f32
    %19 = vector.broadcast %cst_11 : f32 to vector<8x128xf32>
    %20 = arith.mulf %19, %18 : vector<8x128xf32>
    %21 = vector.extract_strided_slice %12 {offsets = [0, 128], sizes = [8, 128], strides = [1, 1]} : vector<8x512xf32> to vector<8x128xf32>
    %cst_12 = arith.constant 5.000000e-01 : f32
    %22 = vector.broadcast %cst_12 : f32 to vector<8x128xf32>
    %23 = arith.mulf %22, %21 : vector<8x128xf32>
    %24 = math.tanh %23 : vector<8x128xf32>
    %cst_13 = arith.constant 1.000000e+00 : f32
    %25 = vector.broadcast %cst_13 : f32 to vector<8x128xf32>
    %26 = arith.addf %24, %25 : vector<8x128xf32>
    %cst_14 = arith.constant 5.000000e-01 : f32
    %27 = vector.broadcast %cst_14 : f32 to vector<8x128xf32>
    %28 = arith.mulf %27, %26 : vector<8x128xf32>
    %29 = vector.extract_strided_slice %12 {offsets = [0, 256], sizes = [8, 128], strides = [1, 1]} : vector<8x512xf32> to vector<8x128xf32>
    %30 = math.tanh %29 : vector<8x128xf32>
    %31 = vector.extract_strided_slice %12 {offsets = [0, 384], sizes = [8, 128], strides = [1, 1]} : vector<8x512xf32> to vector<8x128xf32>
    %cst_15 = arith.constant 5.000000e-01 : f32
    %32 = vector.broadcast %cst_15 : f32 to vector<8x128xf32>
    %33 = arith.mulf %32, %31 : vector<8x128xf32>
    %34 = math.tanh %33 : vector<8x128xf32>
    %cst_16 = arith.constant 1.000000e+00 : f32
    %35 = vector.broadcast %cst_16 : f32 to vector<8x128xf32>
    %36 = arith.addf %34, %35 : vector<8x128xf32>
    %cst_17 = arith.constant 5.000000e-01 : f32
    %37 = vector.broadcast %cst_17 : f32 to vector<8x128xf32>
    %38 = arith.mulf %37, %36 : vector<8x128xf32>
    %39 = arith.mulf %28, %4 : vector<8x128xf32>
    %40 = arith.mulf %20, %30 : vector<8x128xf32>
    %41 = arith.addf %39, %40 : vector<8x128xf32>
    %42 = math.tanh %41 : vector<8x128xf32>
    %43 = arith.mulf %38, %42 : vector<8x128xf32>
    %c8_i32 = arith.constant 8 : i32
    %44 = arith.muli %arg0, %c8_i32 : i32
    %45 = arith.addi %44, %c0_i32_4 : i32
    %c8_i32_18 = arith.constant 8 : i32
    %46 = arith.cmpi slt, %45, %c8_i32_18 : i32
    %47 = arith.select %46, %43, %3 : vector<8x128xf32>
    %48 = arith.select %46, %41, %4 : vector<8x128xf32>
    %49 = arith.index_cast %c0_i32_4 : i32 to index
    %c0_19 = arith.constant 0 : index
    %c0_20 = arith.constant 0 : index
    %50 = vector.load %arg3[%49, %c0_19, %c0_20] : memref<8x8x128xf32, #tpu.memory_space<vmem>>, vector<1x8x128xf32>
    %51 = vector.shape_cast %50 : vector<1x8x128xf32> to vector<8x128xf32>
    %52 = vector.shape_cast %47 : vector<8x128xf32> to vector<1x8x128xf32>
    tpu.vector_store %arg3[%49, %c0_19, %c0_20], %52 {strides = array<i32>} : memref<8x8x128xf32, #tpu.memory_space<vmem>>, vector<1x8x128xf32>,
    %c1_i32 = arith.constant 1 : i32
    %53 = arith.truncf %47 : vector<8x128xf32> to vector<8x128xbf16>
    %c0_21 = arith.constant 0 : index
    %c0_22 = arith.constant 0 : index
    %54 = vector.load %arg2[%c0_21, %c0_22] : memref<128x512xbf16, #tpu.memory_space<vmem>>, vector<128x512xbf16>
    %cst_23 = arith.constant dense<0.000000e+00> : vector<8x512xf32>
    %55 = tpu.matmul %53, %54, %cst_23 {dimension_numbers = #tpu.dot_dimension_numbers<[1], [0], [0], [1], [0, 0, 1, 1], [], []>} : vector<8x128xbf16>, vector<128x512xbf16>, vector<8x512xf32> -> vector<8x512xf32>
    %56 = arith.index_cast %c1_i32 : i32 to index
    %c0_24 = arith.constant 0 : index
    %c0_25 = arith.constant 0 : index
    %57 = vector.load %arg1[%56, %c0_24, %c0_25] : memref<8x8x512xbf16, #tpu.memory_space<vmem>>, vector<1x8x512xbf16>
    %58 = vector.shape_cast %57 : vector<1x8x512xbf16> to vector<8x512xbf16>
    %59 = arith.extf %58 : vector<8x512xbf16> to vector<8x512xf32>
    %60 = arith.addf %59, %55 : vector<8x512xf32>
    %61 = vector.extract_strided_slice %60 {offsets = [0, 0], sizes = [8, 128], strides = [1, 1]} : vector<8x512xf32> to vector<8x128xf32>
    %cst_26 = arith.constant 5.000000e-01 : f32
    %62 = vector.broadcast %cst_26 : f32 to vector<8x128xf32>
    %63 = arith.mulf %62, %61 : vector<8x128xf32>
    %64 = math.tanh %63 : vector<8x128xf32>
    %cst_27 = arith.constant 1.000000e+00 : f32
    %65 = vector.broadcast %cst_27 : f32 to vector<8x128xf32>
    %66 = arith.addf %64, %65 : vector<8x128xf32>
    %cst_28 = arith.constant 5.000000e-01 : f32
    %67 = vector.broadcast %cst_28 : f32 to vector<8x128xf32>
    %68 = arith.mulf %67, %66 : vector<8x128xf32>
    %69 = vector.extract_strided_slice %60 {offsets = [0, 128], sizes = [8, 128], strides = [1, 1]} : vector<8x512xf32> to vector<8x128xf32>
    %cst_29 = arith.constant 5.000000e-01 : f32
    %70 = vector.broadcast %cst_29 : f32 to vector<8x128xf32>
    %71 = arith.mulf %70, %69 : vector<8x128xf32>
    %72 = math.tanh %71 : vector<8x128xf32>
    %cst_30 = arith.constant 1.000000e+00 : f32
    %73 = vector.broadcast %cst_30 : f32 to vector<8x128xf32>
    %74 = arith.addf %72, %73 : vector<8x128xf32>
    %cst_31 = arith.constant 5.000000e-01 : f32
    %75 = vector.broadcast %cst_31 : f32 to vector<8x128xf32>
    %76 = arith.mulf %75, %74 : vector<8x128xf32>
    %77 = vector.extract_strided_slice %60 {offsets = [0, 256], sizes = [8, 128], strides = [1, 1]} : vector<8x512xf32> to vector<8x128xf32>
    %78 = math.tanh %77 : vector<8x128xf32>
    %79 = vector.extract_strided_slice %60 {offsets = [0, 384], sizes = [8, 128], strides = [1, 1]} : vector<8x512xf32> to vector<8x128xf32>
    %cst_32 = arith.constant 5.000000e-01 : f32
    %80 = vector.broadcast %cst_32 : f32 to vector<8x128xf32>
    %81 = arith.mulf %80, %79 : vector<8x128xf32>
    %82 = math.tanh %81 : vector<8x128xf32>
    %cst_33 = arith.constant 1.000000e+00 : f32
    %83 = vector.broadcast %cst_33 : f32 to vector<8x128xf32>
    %84 = arith.addf %82, %83 : vector<8x128xf32>
    %cst_34 = arith.constant 5.000000e-01 : f32
    %85 = vector.broadcast %cst_34 : f32 to vector<8x128xf32>
    %86 = arith.mulf %85, %84 : vector<8x128xf32>
    %87 = arith.mulf %76, %48 : vector<8x128xf32>
    %88 = arith.mulf %68, %78 : vector<8x128xf32>
    %89 = arith.addf %87, %88 : vector<8x128xf32>
    %90 = math.tanh %89 : vector<8x128xf32>
    %91 = arith.mulf %86, %90 : vector<8x128xf32>
    %c8_i32_35 = arith.constant 8 : i32
    %92 = arith.muli %arg0, %c8_i32_35 : i32
    %93 = arith.addi %92, %c1_i32 : i32
    %c8_i32_36 = arith.constant 8 : i32
    %94 = arith.cmpi slt, %93, %c8_i32_36 : i32
    %95 = arith.select %94, %91, %47 : vector<8x128xf32>
    %96 = arith.select %94, %89, %48 : vector<8x128xf32>
    %97 = arith.index_cast %c1_i32 : i32 to index
    %c0_37 = arith.constant 0 : index
    %c0_38 = arith.constant 0 : index
    %98 = vector.load %arg3[%97, %c0_37, %c0_38] : memref<8x8x128xf32, #tpu.memory_space<vmem>>, vector<1x8x128xf32>
    %99 = vector.shape_cast %98 : vector<1x8x128xf32> to vector<8x128xf32>
    %100 = vector.shape_cast %95 : vector<8x128xf32> to vector<1x8x128xf32>
    tpu.vector_store %arg3[%97, %c0_37, %c0_38], %100 {strides = array<i32>} : memref<8x8x128xf32, #tpu.memory_space<vmem>>, vector<1x8x128xf32>,
    %c2_i32 = arith.constant 2 : i32
    %101 = arith.truncf %95 : vector<8x128xf32> to vector<8x128xbf16>
    %c0_39 = arith.constant 0 : index
    %c0_40 = arith.constant 0 : index
    %102 = vector.load %arg2[%c0_39, %c0_40] : memref<128x512xbf16, #tpu.memory_space<vmem>>, vector<128x512xbf16>
    %cst_41 = arith.constant dense<0.000000e+00> : vector<8x512xf32>
    %103 = tpu.matmul %101, %102, %cst_41 {dimension_numbers = #tpu.dot_dimension_numbers<[1], [0], [0], [1], [0, 0, 1, 1], [], []>} : vector<8x128xbf16>, vector<128x512xbf16>, vector<8x512xf32> -> vector<8x512xf32>
    %104 = arith.index_cast %c2_i32 : i32 to index
    %c0_42 = arith.constant 0 : index
    %c0_43 = arith.constant 0 : index
    %105 = vector.load %arg1[%104, %c0_42, %c0_43] : memref<8x8x512xbf16, #tpu.memory_space<vmem>>, vector<1x8x512xbf16>
    %106 = vector.shape_cast %105 : vector<1x8x512xbf16> to vector<8x512xbf16>
    %107 = arith.extf %106 : vector<8x512xbf16> to vector<8x512xf32>
    %108 = arith.addf %107, %103 : vector<8x512xf32>
    %109 = vector.extract_strided_slice %108 {offsets = [0, 0], sizes = [8, 128], strides = [1, 1]} : vector<8x512xf32> to vector<8x128xf32>
    %cst_44 = arith.constant 5.000000e-01 : f32
    %110 = vector.broadcast %cst_44 : f32 to vector<8x128xf32>
    %111 = arith.mulf %110, %109 : vector<8x128xf32>
    %112 = math.tanh %111 : vector<8x128xf32>
    %cst_45 = arith.constant 1.000000e+00 : f32
    %113 = vector.broadcast %cst_45 : f32 to vector<8x128xf32>
    %114 = arith.addf %112, %113 : vector<8x128xf32>
    %cst_46 = arith.constant 5.000000e-01 : f32
    %115 = vector.broadcast %cst_46 : f32 to vector<8x128xf32>
    %116 = arith.mulf %115, %114 : vector<8x128xf32>
    %117 = vector.extract_strided_slice %108 {offsets = [0, 128], sizes = [8, 128], strides = [1, 1]} : vector<8x512xf32> to vector<8x128xf32>
    %cst_47 = arith.constant 5.000000e-01 : f32
    %118 = vector.broadcast %cst_47 : f32 to vector<8x128xf32>
    %119 = arith.mulf %118, %117 : vector<8x128xf32>
    %120 = math.tanh %119 : vector<8x128xf32>
    %cst_48 = arith.constant 1.000000e+00 : f32
    %121 = vector.broadcast %cst_48 : f32 to vector<8x128xf32>
    %122 = arith.addf %120, %121 : vector<8x128xf32>
    %cst_49 = arith.constant 5.000000e-01 : f32
    %123 = vector.broadcast %cst_49 : f32 to vector<8x128xf32>
    %124 = arith.mulf %123, %122 : vector<8x128xf32>
    %125 = vector.extract_strided_slice %108 {offsets = [0, 256], sizes = [8, 128], strides = [1, 1]} : vector<8x512xf32> to vector<8x128xf32>
    %126 = math.tanh %125 : vector<8x128xf32>
    %127 = vector.extract_strided_slice %108 {offsets = [0, 384], sizes = [8, 128], strides = [1, 1]} : vector<8x512xf32> to vector<8x128xf32>
    %cst_50 = arith.constant 5.000000e-01 : f32
    %128 = vector.broadcast %cst_50 : f32 to vector<8x128xf32>
    %129 = arith.mulf %128, %127 : vector<8x128xf32>
    %130 = math.tanh %129 : vector<8x128xf32>
    %cst_51 = arith.constant 1.000000e+00 : f32
    %131 = vector.broadcast %cst_51 : f32 to vector<8x128xf32>
    %132 = arith.addf %130, %131 : vector<8x128xf32>
    %cst_52 = arith.constant 5.000000e-01 : f32
    %133 = vector.broadcast %cst_52 : f32 to vector<8x128xf32>
    %134 = arith.mulf %133, %132 : vector<8x128xf32>
    %135 = arith.mulf %124, %96 : vector<8x128xf32>
    %136 = arith.mulf %116, %126 : vector<8x128xf32>
    %137 = arith.addf %135, %136 : vector<8x128xf32>
    %138 = math.tanh %137 : vector<8x128xf32>
    %139 = arith.mulf %134, %138 : vector<8x128xf32>
    %c8_i32_53 = arith.constant 8 : i32
    %140 = arith.muli %arg0, %c8_i32_53 : i32
    %141 = arith.addi %140, %c2_i32 : i32
    %c8_i32_54 = arith.constant 8 : i32
    %142 = arith.cmpi slt, %141, %c8_i32_54 : i32
    %143 = arith.select %142, %139, %95 : vector<8x128xf32>
    %144 = arith.select %142, %137, %96 : vector<8x128xf32>
    %145 = arith.index_cast %c2_i32 : i32 to index
    %c0_55 = arith.constant 0 : index
    %c0_56 = arith.constant 0 : index
    %146 = vector.load %arg3[%145, %c0_55, %c0_56] : memref<8x8x128xf32, #tpu.memory_space<vmem>>, vector<1x8x128xf32>
    %147 = vector.shape_cast %146 : vector<1x8x128xf32> to vector<8x128xf32>
    %148 = vector.shape_cast %143 : vector<8x128xf32> to vector<1x8x128xf32>
    tpu.vector_store %arg3[%145, %c0_55, %c0_56], %148 {strides = array<i32>} : memref<8x8x128xf32, #tpu.memory_space<vmem>>, vector<1x8x128xf32>,
    %c3_i32 = arith.constant 3 : i32
    %149 = arith.truncf %143 : vector<8x128xf32> to vector<8x128xbf16>
    %c0_57 = arith.constant 0 : index
    %c0_58 = arith.constant 0 : index
    %150 = vector.load %arg2[%c0_57, %c0_58] : memref<128x512xbf16, #tpu.memory_space<vmem>>, vector<128x512xbf16>
    %cst_59 = arith.constant dense<0.000000e+00> : vector<8x512xf32>
    %151 = tpu.matmul %149, %150, %cst_59 {dimension_numbers = #tpu.dot_dimension_numbers<[1], [0], [0], [1], [0, 0, 1, 1], [], []>} : vector<8x128xbf16>, vector<128x512xbf16>, vector<8x512xf32> -> vector<8x512xf32>
    %152 = arith.index_cast %c3_i32 : i32 to index
    %c0_60 = arith.constant 0 : index
    %c0_61 = arith.constant 0 : index
    %153 = vector.load %arg1[%152, %c0_60, %c0_61] : memref<8x8x512xbf16, #tpu.memory_space<vmem>>, vector<1x8x512xbf16>
    %154 = vector.shape_cast %153 : vector<1x8x512xbf16> to vector<8x512xbf16>
    %155 = arith.extf %154 : vector<8x512xbf16> to vector<8x512xf32>
    %156 = arith.addf %155, %151 : vector<8x512xf32>
    %157 = vector.extract_strided_slice %156 {offsets = [0, 0], sizes = [8, 128], strides = [1, 1]} : vector<8x512xf32> to vector<8x128xf32>
    %cst_62 = arith.constant 5.000000e-01 : f32
    %158 = vector.broadcast %cst_62 : f32 to vector<8x128xf32>
    %159 = arith.mulf %158, %157 : vector<8x128xf32>
    %160 = math.tanh %159 : vector<8x128xf32>
    %cst_63 = arith.constant 1.000000e+00 : f32
    %161 = vector.broadcast %cst_63 : f32 to vector<8x128xf32>
    %162 = arith.addf %160, %161 : vector<8x128xf32>
    %cst_64 = arith.constant 5.000000e-01 : f32
    %163 = vector.broadcast %cst_64 : f32 to vector<8x128xf32>
    %164 = arith.mulf %163, %162 : vector<8x128xf32>
    %165 = vector.extract_strided_slice %156 {offsets = [0, 128], sizes = [8, 128], strides = [1, 1]} : vector<8x512xf32> to vector<8x128xf32>
    %cst_65 = arith.constant 5.000000e-01 : f32
    %166 = vector.broadcast %cst_65 : f32 to vector<8x128xf32>
    %167 = arith.mulf %166, %165 : vector<8x128xf32>
    %168 = math.tanh %167 : vector<8x128xf32>
    %cst_66 = arith.constant 1.000000e+00 : f32
    %169 = vector.broadcast %cst_66 : f32 to vector<8x128xf32>
    %170 = arith.addf %168, %169 : vector<8x128xf32>
    %cst_67 = arith.constant 5.000000e-01 : f32
    %171 = vector.broadcast %cst_67 : f32 to vector<8x128xf32>
    %172 = arith.mulf %171, %170 : vector<8x128xf32>
    %173 = vector.extract_strided_slice %156 {offsets = [0, 256], sizes = [8, 128], strides = [1, 1]} : vector<8x512xf32> to vector<8x128xf32>
    %174 = math.tanh %173 : vector<8x128xf32>
    %175 = vector.extract_strided_slice %156 {offsets = [0, 384], sizes = [8, 128], strides = [1, 1]} : vector<8x512xf32> to vector<8x128xf32>
    %cst_68 = arith.constant 5.000000e-01 : f32
    %176 = vector.broadcast %cst_68 : f32 to vector<8x128xf32>
    %177 = arith.mulf %176, %175 : vector<8x128xf32>
    %178 = math.tanh %177 : vector<8x128xf32>
    %cst_69 = arith.constant 1.000000e+00 : f32
    %179 = vector.broadcast %cst_69 : f32 to vector<8x128xf32>
    %180 = arith.addf %178, %179 : vector<8x128xf32>
    %cst_70 = arith.constant 5.000000e-01 : f32
    %181 = vector.broadcast %cst_70 : f32 to vector<8x128xf32>
    %182 = arith.mulf %181, %180 : vector<8x128xf32>
    %183 = arith.mulf %172, %144 : vector<8x128xf32>
    %184 = arith.mulf %164, %174 : vector<8x128xf32>
    %185 = arith.addf %183, %184 : vector<8x128xf32>
    %186 = math.tanh %185 : vector<8x128xf32>
    %187 = arith.mulf %182, %186 : vector<8x128xf32>
    %c8_i32_71 = arith.constant 8 : i32
    %188 = arith.muli %arg0, %c8_i32_71 : i32
    %189 = arith.addi %188, %c3_i32 : i32
    %c8_i32_72 = arith.constant 8 : i32
    %190 = arith.cmpi slt, %189, %c8_i32_72 : i32
    %191 = arith.select %190, %187, %143 : vector<8x128xf32>
    %192 = arith.select %190, %185, %144 : vector<8x128xf32>
    %193 = arith.index_cast %c3_i32 : i32 to index
    %c0_73 = arith.constant 0 : index
    %c0_74 = arith.constant 0 : index
    %194 = vector.load %arg3[%193, %c0_73, %c0_74] : memref<8x8x128xf32, #tpu.memory_space<vmem>>, vector<1x8x128xf32>
    %195 = vector.shape_cast %194 : vector<1x8x128xf32> to vector<8x128xf32>
    %196 = vector.shape_cast %191 : vector<8x128xf32> to vector<1x8x128xf32>
    tpu.vector_store %arg3[%193, %c0_73, %c0_74], %196 {strides = array<i32>} : memref<8x8x128xf32, #tpu.memory_space<vmem>>, vector<1x8x128xf32>,
    %c4_i32 = arith.constant 4 : i32
    %197 = arith.truncf %191 : vector<8x128xf32> to vector<8x128xbf16>
    %c0_75 = arith.constant 0 : index
    %c0_76 = arith.constant 0 : index
    %198 = vector.load %arg2[%c0_75, %c0_76] : memref<128x512xbf16, #tpu.memory_space<vmem>>, vector<128x512xbf16>
    %cst_77 = arith.constant dense<0.000000e+00> : vector<8x512xf32>
    %199 = tpu.matmul %197, %198, %cst_77 {dimension_numbers = #tpu.dot_dimension_numbers<[1], [0], [0], [1], [0, 0, 1, 1], [], []>} : vector<8x128xbf16>, vector<128x512xbf16>, vector<8x512xf32> -> vector<8x512xf32>
    %200 = arith.index_cast %c4_i32 : i32 to index
    %c0_78 = arith.constant 0 : index
    %c0_79 = arith.constant 0 : index
    %201 = vector.load %arg1[%200, %c0_78, %c0_79] : memref<8x8x512xbf16, #tpu.memory_space<vmem>>, vector<1x8x512xbf16>
    %202 = vector.shape_cast %201 : vector<1x8x512xbf16> to vector<8x512xbf16>
    %203 = arith.extf %202 : vector<8x512xbf16> to vector<8x512xf32>
    %204 = arith.addf %203, %199 : vector<8x512xf32>
    %205 = vector.extract_strided_slice %204 {offsets = [0, 0], sizes = [8, 128], strides = [1, 1]} : vector<8x512xf32> to vector<8x128xf32>
    %cst_80 = arith.constant 5.000000e-01 : f32
    %206 = vector.broadcast %cst_80 : f32 to vector<8x128xf32>
    %207 = arith.mulf %206, %205 : vector<8x128xf32>
    %208 = math.tanh %207 : vector<8x128xf32>
    %cst_81 = arith.constant 1.000000e+00 : f32
    %209 = vector.broadcast %cst_81 : f32 to vector<8x128xf32>
    %210 = arith.addf %208, %209 : vector<8x128xf32>
    %cst_82 = arith.constant 5.000000e-01 : f32
    %211 = vector.broadcast %cst_82 : f32 to vector<8x128xf32>
    %212 = arith.mulf %211, %210 : vector<8x128xf32>
    %213 = vector.extract_strided_slice %204 {offsets = [0, 128], sizes = [8, 128], strides = [1, 1]} : vector<8x512xf32> to vector<8x128xf32>
    %cst_83 = arith.constant 5.000000e-01 : f32
    %214 = vector.broadcast %cst_83 : f32 to vector<8x128xf32>
    %215 = arith.mulf %214, %213 : vector<8x128xf32>
    %216 = math.tanh %215 : vector<8x128xf32>
    %cst_84 = arith.constant 1.000000e+00 : f32
    %217 = vector.broadcast %cst_84 : f32 to vector<8x128xf32>
    %218 = arith.addf %216, %217 : vector<8x128xf32>
    %cst_85 = arith.constant 5.000000e-01 : f32
    %219 = vector.broadcast %cst_85 : f32 to vector<8x128xf32>
    %220 = arith.mulf %219, %218 : vector<8x128xf32>
    %221 = vector.extract_strided_slice %204 {offsets = [0, 256], sizes = [8, 128], strides = [1, 1]} : vector<8x512xf32> to vector<8x128xf32>
    %222 = math.tanh %221 : vector<8x128xf32>
    %223 = vector.extract_strided_slice %204 {offsets = [0, 384], sizes = [8, 128], strides = [1, 1]} : vector<8x512xf32> to vector<8x128xf32>
    %cst_86 = arith.constant 5.000000e-01 : f32
    %224 = vector.broadcast %cst_86 : f32 to vector<8x128xf32>
    %225 = arith.mulf %224, %223 : vector<8x128xf32>
    %226 = math.tanh %225 : vector<8x128xf32>
    %cst_87 = arith.constant 1.000000e+00 : f32
    %227 = vector.broadcast %cst_87 : f32 to vector<8x128xf32>
    %228 = arith.addf %226, %227 : vector<8x128xf32>
    %cst_88 = arith.constant 5.000000e-01 : f32
    %229 = vector.broadcast %cst_88 : f32 to vector<8x128xf32>
    %230 = arith.mulf %229, %228 : vector<8x128xf32>
    %231 = arith.mulf %220, %192 : vector<8x128xf32>
    %232 = arith.mulf %212, %222 : vector<8x128xf32>
    %233 = arith.addf %231, %232 : vector<8x128xf32>
    %234 = math.tanh %233 : vector<8x128xf32>
    %235 = arith.mulf %230, %234 : vector<8x128xf32>
    %c8_i32_89 = arith.constant 8 : i32
    %236 = arith.muli %arg0, %c8_i32_89 : i32
    %237 = arith.addi %236, %c4_i32 : i32
    %c8_i32_90 = arith.constant 8 : i32
    %238 = arith.cmpi slt, %237, %c8_i32_90 : i32
    %239 = arith.select %238, %235, %191 : vector<8x128xf32>
    %240 = arith.select %238, %233, %192 : vector<8x128xf32>
    %241 = arith.index_cast %c4_i32 : i32 to index
    %c0_91 = arith.constant 0 : index
    %c0_92 = arith.constant 0 : index
    %242 = vector.load %arg3[%241, %c0_91, %c0_92] : memref<8x8x128xf32, #tpu.memory_space<vmem>>, vector<1x8x128xf32>
    %243 = vector.shape_cast %242 : vector<1x8x128xf32> to vector<8x128xf32>
    %244 = vector.shape_cast %239 : vector<8x128xf32> to vector<1x8x128xf32>
    tpu.vector_store %arg3[%241, %c0_91, %c0_92], %244 {strides = array<i32>} : memref<8x8x128xf32, #tpu.memory_space<vmem>>, vector<1x8x128xf32>,
    %c5_i32 = arith.constant 5 : i32
    %245 = arith.truncf %239 : vector<8x128xf32> to vector<8x128xbf16>
    %c0_93 = arith.constant 0 : index
    %c0_94 = arith.constant 0 : index
    %246 = vector.load %arg2[%c0_93, %c0_94] : memref<128x512xbf16, #tpu.memory_space<vmem>>, vector<128x512xbf16>
    %cst_95 = arith.constant dense<0.000000e+00> : vector<8x512xf32>
    %247 = tpu.matmul %245, %246, %cst_95 {dimension_numbers = #tpu.dot_dimension_numbers<[1], [0], [0], [1], [0, 0, 1, 1], [], []>} : vector<8x128xbf16>, vector<128x512xbf16>, vector<8x512xf32> -> vector<8x512xf32>
    %248 = arith.index_cast %c5_i32 : i32 to index
    %c0_96 = arith.constant 0 : index
    %c0_97 = arith.constant 0 : index
    %249 = vector.load %arg1[%248, %c0_96, %c0_97] : memref<8x8x512xbf16, #tpu.memory_space<vmem>>, vector<1x8x512xbf16>
    %250 = vector.shape_cast %249 : vector<1x8x512xbf16> to vector<8x512xbf16>
    %251 = arith.extf %250 : vector<8x512xbf16> to vector<8x512xf32>
    %252 = arith.addf %251, %247 : vector<8x512xf32>
    %253 = vector.extract_strided_slice %252 {offsets = [0, 0], sizes = [8, 128], strides = [1, 1]} : vector<8x512xf32> to vector<8x128xf32>
    %cst_98 = arith.constant 5.000000e-01 : f32
    %254 = vector.broadcast %cst_98 : f32 to vector<8x128xf32>
    %255 = arith.mulf %254, %253 : vector<8x128xf32>
    %256 = math.tanh %255 : vector<8x128xf32>
    %cst_99 = arith.constant 1.000000e+00 : f32
    %257 = vector.broadcast %cst_99 : f32 to vector<8x128xf32>
    %258 = arith.addf %256, %257 : vector<8x128xf32>
    %cst_100 = arith.constant 5.000000e-01 : f32
    %259 = vector.broadcast %cst_100 : f32 to vector<8x128xf32>
    %260 = arith.mulf %259, %258 : vector<8x128xf32>
    %261 = vector.extract_strided_slice %252 {offsets = [0, 128], sizes = [8, 128], strides = [1, 1]} : vector<8x512xf32> to vector<8x128xf32>
    %cst_101 = arith.constant 5.000000e-01 : f32
    %262 = vector.broadcast %cst_101 : f32 to vector<8x128xf32>
    %263 = arith.mulf %262, %261 : vector<8x128xf32>
    %264 = math.tanh %263 : vector<8x128xf32>
    %cst_102 = arith.constant 1.000000e+00 : f32
    %265 = vector.broadcast %cst_102 : f32 to vector<8x128xf32>
    %266 = arith.addf %264, %265 : vector<8x128xf32>
    %cst_103 = arith.constant 5.000000e-01 : f32
    %267 = vector.broadcast %cst_103 : f32 to vector<8x128xf32>
    %268 = arith.mulf %267, %266 : vector<8x128xf32>
    %269 = vector.extract_strided_slice %252 {offsets = [0, 256], sizes = [8, 128], strides = [1, 1]} : vector<8x512xf32> to vector<8x128xf32>
    %270 = math.tanh %269 : vector<8x128xf32>
    %271 = vector.extract_strided_slice %252 {offsets = [0, 384], sizes = [8, 128], strides = [1, 1]} : vector<8x512xf32> to vector<8x128xf32>
    %cst_104 = arith.constant 5.000000e-01 : f32
    %272 = vector.broadcast %cst_104 : f32 to vector<8x128xf32>
    %273 = arith.mulf %272, %271 : vector<8x128xf32>
    %274 = math.tanh %273 : vector<8x128xf32>
    %cst_105 = arith.constant 1.000000e+00 : f32
    %275 = vector.broadcast %cst_105 : f32 to vector<8x128xf32>
    %276 = arith.addf %274, %275 : vector<8x128xf32>
    %cst_106 = arith.constant 5.000000e-01 : f32
    %277 = vector.broadcast %cst_106 : f32 to vector<8x128xf32>
    %278 = arith.mulf %277, %276 : vector<8x128xf32>
    %279 = arith.mulf %268, %240 : vector<8x128xf32>
    %280 = arith.mulf %260, %270 : vector<8x128xf32>
    %281 = arith.addf %279, %280 : vector<8x128xf32>
    %282 = math.tanh %281 : vector<8x128xf32>
    %283 = arith.mulf %278, %282 : vector<8x128xf32>
    %c8_i32_107 = arith.constant 8 : i32
    %284 = arith.muli %arg0, %c8_i32_107 : i32
    %285 = arith.addi %284, %c5_i32 : i32
    %c8_i32_108 = arith.constant 8 : i32
    %286 = arith.cmpi slt, %285, %c8_i32_108 : i32
    %287 = arith.select %286, %283, %239 : vector<8x128xf32>
    %288 = arith.select %286, %281, %240 : vector<8x128xf32>
    %289 = arith.index_cast %c5_i32 : i32 to index
    %c0_109 = arith.constant 0 : index
    %c0_110 = arith.constant 0 : index
    %290 = vector.load %arg3[%289, %c0_109, %c0_110] : memref<8x8x128xf32, #tpu.memory_space<vmem>>, vector<1x8x128xf32>
    %291 = vector.shape_cast %290 : vector<1x8x128xf32> to vector<8x128xf32>
    %292 = vector.shape_cast %287 : vector<8x128xf32> to vector<1x8x128xf32>
    tpu.vector_store %arg3[%289, %c0_109, %c0_110], %292 {strides = array<i32>} : memref<8x8x128xf32, #tpu.memory_space<vmem>>, vector<1x8x128xf32>,
    %c6_i32 = arith.constant 6 : i32
    %293 = arith.truncf %287 : vector<8x128xf32> to vector<8x128xbf16>
    %c0_111 = arith.constant 0 : index
    %c0_112 = arith.constant 0 : index
    %294 = vector.load %arg2[%c0_111, %c0_112] : memref<128x512xbf16, #tpu.memory_space<vmem>>, vector<128x512xbf16>
    %cst_113 = arith.constant dense<0.000000e+00> : vector<8x512xf32>
    %295 = tpu.matmul %293, %294, %cst_113 {dimension_numbers = #tpu.dot_dimension_numbers<[1], [0], [0], [1], [0, 0, 1, 1], [], []>} : vector<8x128xbf16>, vector<128x512xbf16>, vector<8x512xf32> -> vector<8x512xf32>
    %296 = arith.index_cast %c6_i32 : i32 to index
    %c0_114 = arith.constant 0 : index
    %c0_115 = arith.constant 0 : index
    %297 = vector.load %arg1[%296, %c0_114, %c0_115] : memref<8x8x512xbf16, #tpu.memory_space<vmem>>, vector<1x8x512xbf16>
    %298 = vector.shape_cast %297 : vector<1x8x512xbf16> to vector<8x512xbf16>
    %299 = arith.extf %298 : vector<8x512xbf16> to vector<8x512xf32>
    %300 = arith.addf %299, %295 : vector<8x512xf32>
    %301 = vector.extract_strided_slice %300 {offsets = [0, 0], sizes = [8, 128], strides = [1, 1]} : vector<8x512xf32> to vector<8x128xf32>
    %cst_116 = arith.constant 5.000000e-01 : f32
    %302 = vector.broadcast %cst_116 : f32 to vector<8x128xf32>
    %303 = arith.mulf %302, %301 : vector<8x128xf32>
    %304 = math.tanh %303 : vector<8x128xf32>
    %cst_117 = arith.constant 1.000000e+00 : f32
    %305 = vector.broadcast %cst_117 : f32 to vector<8x128xf32>
    %306 = arith.addf %304, %305 : vector<8x128xf32>
    %cst_118 = arith.constant 5.000000e-01 : f32
    %307 = vector.broadcast %cst_118 : f32 to vector<8x128xf32>
    %308 = arith.mulf %307, %306 : vector<8x128xf32>
    %309 = vector.extract_strided_slice %300 {offsets = [0, 128], sizes = [8, 128], strides = [1, 1]} : vector<8x512xf32> to vector<8x128xf32>
    %cst_119 = arith.constant 5.000000e-01 : f32
    %310 = vector.broadcast %cst_119 : f32 to vector<8x128xf32>
    %311 = arith.mulf %310, %309 : vector<8x128xf32>
    %312 = math.tanh %311 : vector<8x128xf32>
    %cst_120 = arith.constant 1.000000e+00 : f32
    %313 = vector.broadcast %cst_120 : f32 to vector<8x128xf32>
    %314 = arith.addf %312, %313 : vector<8x128xf32>
    %cst_121 = arith.constant 5.000000e-01 : f32
    %315 = vector.broadcast %cst_121 : f32 to vector<8x128xf32>
    %316 = arith.mulf %315, %314 : vector<8x128xf32>
    %317 = vector.extract_strided_slice %300 {offsets = [0, 256], sizes = [8, 128], strides = [1, 1]} : vector<8x512xf32> to vector<8x128xf32>
    %318 = math.tanh %317 : vector<8x128xf32>
    %319 = vector.extract_strided_slice %300 {offsets = [0, 384], sizes = [8, 128], strides = [1, 1]} : vector<8x512xf32> to vector<8x128xf32>
    %cst_122 = arith.constant 5.000000e-01 : f32
    %320 = vector.broadcast %cst_122 : f32 to vector<8x128xf32>
    %321 = arith.mulf %320, %319 : vector<8x128xf32>
    %322 = math.tanh %321 : vector<8x128xf32>
    %cst_123 = arith.constant 1.000000e+00 : f32
    %323 = vector.broadcast %cst_123 : f32 to vector<8x128xf32>
    %324 = arith.addf %322, %323 : vector<8x128xf32>
    %cst_124 = arith.constant 5.000000e-01 : f32
    %325 = vector.broadcast %cst_124 : f32 to vector<8x128xf32>
    %326 = arith.mulf %325, %324 : vector<8x128xf32>
    %327 = arith.mulf %316, %288 : vector<8x128xf32>
    %328 = arith.mulf %308, %318 : vector<8x128xf32>
    %329 = arith.addf %327, %328 : vector<8x128xf32>
    %330 = math.tanh %329 : vector<8x128xf32>
    %331 = arith.mulf %326, %330 : vector<8x128xf32>
    %c8_i32_125 = arith.constant 8 : i32
    %332 = arith.muli %arg0, %c8_i32_125 : i32
    %333 = arith.addi %332, %c6_i32 : i32
    %c8_i32_126 = arith.constant 8 : i32
    %334 = arith.cmpi slt, %333, %c8_i32_126 : i32
    %335 = arith.select %334, %331, %287 : vector<8x128xf32>
    %336 = arith.select %334, %329, %288 : vector<8x128xf32>
    %337 = arith.index_cast %c6_i32 : i32 to index
    %c0_127 = arith.constant 0 : index
    %c0_128 = arith.constant 0 : index
    %338 = vector.load %arg3[%337, %c0_127, %c0_128] : memref<8x8x128xf32, #tpu.memory_space<vmem>>, vector<1x8x128xf32>
    %339 = vector.shape_cast %338 : vector<1x8x128xf32> to vector<8x128xf32>
    %340 = vector.shape_cast %335 : vector<8x128xf32> to vector<1x8x128xf32>
    tpu.vector_store %arg3[%337, %c0_127, %c0_128], %340 {strides = array<i32>} : memref<8x8x128xf32, #tpu.memory_space<vmem>>, vector<1x8x128xf32>,
    %c7_i32 = arith.constant 7 : i32
    %341 = arith.truncf %335 : vector<8x128xf32> to vector<8x128xbf16>
    %c0_129 = arith.constant 0 : index
    %c0_130 = arith.constant 0 : index
    %342 = vector.load %arg2[%c0_129, %c0_130] : memref<128x512xbf16, #tpu.memory_space<vmem>>, vector<128x512xbf16>
    %cst_131 = arith.constant dense<0.000000e+00> : vector<8x512xf32>
    %343 = tpu.matmul %341, %342, %cst_131 {dimension_numbers = #tpu.dot_dimension_numbers<[1], [0], [0], [1], [0, 0, 1, 1], [], []>} : vector<8x128xbf16>, vector<128x512xbf16>, vector<8x512xf32> -> vector<8x512xf32>
    %344 = arith.index_cast %c7_i32 : i32 to index
    %c0_132 = arith.constant 0 : index
    %c0_133 = arith.constant 0 : index
    %345 = vector.load %arg1[%344, %c0_132, %c0_133] : memref<8x8x512xbf16, #tpu.memory_space<vmem>>, vector<1x8x512xbf16>
    %346 = vector.shape_cast %345 : vector<1x8x512xbf16> to vector<8x512xbf16>
    %347 = arith.extf %346 : vector<8x512xbf16> to vector<8x512xf32>
    %348 = arith.addf %347, %343 : vector<8x512xf32>
    %349 = vector.extract_strided_slice %348 {offsets = [0, 0], sizes = [8, 128], strides = [1, 1]} : vector<8x512xf32> to vector<8x128xf32>
    %cst_134 = arith.constant 5.000000e-01 : f32
    %350 = vector.broadcast %cst_134 : f32 to vector<8x128xf32>
    %351 = arith.mulf %350, %349 : vector<8x128xf32>
    %352 = math.tanh %351 : vector<8x128xf32>
    %cst_135 = arith.constant 1.000000e+00 : f32
    %353 = vector.broadcast %cst_135 : f32 to vector<8x128xf32>
    %354 = arith.addf %352, %353 : vector<8x128xf32>
    %cst_136 = arith.constant 5.000000e-01 : f32
    %355 = vector.broadcast %cst_136 : f32 to vector<8x128xf32>
    %356 = arith.mulf %355, %354 : vector<8x128xf32>
    %357 = vector.extract_strided_slice %348 {offsets = [0, 128], sizes = [8, 128], strides = [1, 1]} : vector<8x512xf32> to vector<8x128xf32>
    %cst_137 = arith.constant 5.000000e-01 : f32
    %358 = vector.broadcast %cst_137 : f32 to vector<8x128xf32>
    %359 = arith.mulf %358, %357 : vector<8x128xf32>
    %360 = math.tanh %359 : vector<8x128xf32>
    %cst_138 = arith.constant 1.000000e+00 : f32
    %361 = vector.broadcast %cst_138 : f32 to vector<8x128xf32>
    %362 = arith.addf %360, %361 : vector<8x128xf32>
    %cst_139 = arith.constant 5.000000e-01 : f32
    %363 = vector.broadcast %cst_139 : f32 to vector<8x128xf32>
    %364 = arith.mulf %363, %362 : vector<8x128xf32>
    %365 = vector.extract_strided_slice %348 {offsets = [0, 256], sizes = [8, 128], strides = [1, 1]} : vector<8x512xf32> to vector<8x128xf32>
    %366 = math.tanh %365 : vector<8x128xf32>
    %367 = vector.extract_strided_slice %348 {offsets = [0, 384], sizes = [8, 128], strides = [1, 1]} : vector<8x512xf32> to vector<8x128xf32>
    %cst_140 = arith.constant 5.000000e-01 : f32
    %368 = vector.broadcast %cst_140 : f32 to vector<8x128xf32>
    %369 = arith.mulf %368, %367 : vector<8x128xf32>
    %370 = math.tanh %369 : vector<8x128xf32>
    %cst_141 = arith.constant 1.000000e+00 : f32
    %371 = vector.broadcast %cst_141 : f32 to vector<8x128xf32>
    %372 = arith.addf %370, %371 : vector<8x128xf32>
    %cst_142 = arith.constant 5.000000e-01 : f32
    %373 = vector.broadcast %cst_142 : f32 to vector<8x128xf32>
    %374 = arith.mulf %373, %372 : vector<8x128xf32>
    %375 = arith.mulf %364, %336 : vector<8x128xf32>
    %376 = arith.mulf %356, %366 : vector<8x128xf32>
    %377 = arith.addf %375, %376 : vector<8x128xf32>
    %378 = math.tanh %377 : vector<8x128xf32>
    %379 = arith.mulf %374, %378 : vector<8x128xf32>
    %c8_i32_143 = arith.constant 8 : i32
    %380 = arith.muli %arg0, %c8_i32_143 : i32
    %381 = arith.addi %380, %c7_i32 : i32
    %c8_i32_144 = arith.constant 8 : i32
    %382 = arith.cmpi slt, %381, %c8_i32_144 : i32
    %383 = arith.select %382, %379, %335 : vector<8x128xf32>
    %384 = arith.select %382, %377, %336 : vector<8x128xf32>
    %385 = arith.index_cast %c7_i32 : i32 to index
    %c0_145 = arith.constant 0 : index
    %c0_146 = arith.constant 0 : index
    %386 = vector.load %arg3[%385, %c0_145, %c0_146] : memref<8x8x128xf32, #tpu.memory_space<vmem>>, vector<1x8x128xf32>
    %387 = vector.shape_cast %386 : vector<1x8x128xf32> to vector<8x128xf32>
    %388 = vector.shape_cast %383 : vector<8x128xf32> to vector<1x8x128xf32>
    tpu.vector_store %arg3[%385, %c0_145, %c0_146], %388 {strides = array<i32>} : memref<8x8x128xf32, #tpu.memory_space<vmem>>, vector<1x8x128xf32>,
    %c8_i32_147 = arith.constant 8 : i32
    %c0_148 = arith.constant 0 : index
    %c0_149 = arith.constant 0 : index
    %389 = vector.load %arg5[%c0_148, %c0_149] : memref<8x128xf32, #tpu.memory_space<vmem>>, vector<8x128xf32>
    tpu.vector_store %arg5[%c0_148, %c0_149], %383 {strides = array<i32>} : memref<8x128xf32, #tpu.memory_space<vmem>>, vector<8x128xf32>,
    %c0_150 = arith.constant 0 : index
    %c0_151 = arith.constant 0 : index
    %390 = vector.load %arg6[%c0_150, %c0_151] : memref<8x128xf32, #tpu.memory_space<vmem>>, vector<8x128xf32>
    tpu.vector_store %arg6[%c0_150, %c0_151], %384 {strides = array<i32>} : memref<8x128xf32, #tpu.memory_space<vmem>>, vector<8x128xf32>,
    %c0_152 = arith.constant 0 : index
    %c0_153 = arith.constant 0 : index
    %c0_154 = arith.constant 0 : index
    %391 = vector.load %arg4[%c0_152, %c0_153, %c0_154] : memref<1x8x128xf32, #tpu.memory_space<vmem>>, vector<1x8x128xf32>
    %392 = vector.shape_cast %391 : vector<1x8x128xf32> to vector<8x128xf32>
    %393 = vector.shape_cast %384 : vector<8x128xf32> to vector<1x8x128xf32>
    tpu.vector_store %arg4[%c0_152, %c0_153, %c0_154], %393 {strides = array<i32>} : memref<1x8x128xf32, #tpu.memory_space<vmem>>, vector<1x8x128xf32>,
    return
  }
  func.func @transform_0(%arg0: i32) -> (i32, i32, i32) {
    %c0_i32 = arith.constant 0 : i32
    %c0_i32_0 = arith.constant 0 : i32
    %c0_i32_1 = arith.constant 0 : i32
    return %arg0, %c0_i32, %c0_i32_0 : i32, i32, i32
  }
  func.func @transform_1(%arg0: i32) -> (i32, i32) {
    %c0_i32 = arith.constant 0 : i32
    %c0_i32_0 = arith.constant 0 : i32
    %c0_i32_1 = arith.constant 0 : i32
    return %c0_i32, %c0_i32_0 : i32, i32
  }
  func.func @transform_2(%arg0: i32) -> (i32, i32, i32) {
    %c0_i32 = arith.constant 0 : i32
    %c0_i32_0 = arith.constant 0 : i32
    %c0_i32_1 = arith.constant 0 : i32
    return %arg0, %c0_i32, %c0_i32_0 : i32, i32, i32
  }
  func.func @transform_3(%arg0: i32) -> (i32, i32, i32) {
    %c0_i32 = arith.constant 0 : i32
    %c0_i32_0 = arith.constant 0 : i32
    %c0_i32_1 = arith.constant 0 : i32
    %c0_i32_2 = arith.constant 0 : i32
    return %c0_i32, %c0_i32_0, %c0_i32_1 : i32, i32, i32
  }
}

</mosaic_0001>

<llo_original>
// kernel: tpu_custom_call.1
$region0: #{tpu_custom_call.1}
  #allocation0 [shape = 'u32[]', space=smem, size = 0x4, offset = 0x4, fixed_abs, tag = 'smem constant byte address 0x4 - core index']
  #allocation1 [shape = 'u32[144,128]{1,0:T(1,128)}', space=vmem, size = 0x12000, scoped, tag = 'internal scratch']
  #allocation2 [shape = 'f32[8,128]{1,0:T(8,128)}', space=vmem, size = 0x1000, scoped, tag = 'scratch operand']
  #allocation3 [shape = 'f32[8,128]{1,0:T(8,128)}', space=vmem, size = 0x1000, scoped, tag = 'scratch operand']
  %s0 = inlined_call_operand.hbm [shape: bf16[8,8,512], index: 0, kind: input, shape index: {}]
  %s1 = inlined_call_operand.hbm [shape: bf16[128,512], index: 1, kind: input, shape index: {}]
  %s2 = inlined_call_operand.hbm [shape: f32[8,8,128], index: 2, kind: output, shape index: {0}]
  %s3 = inlined_call_operand.hbm [shape: f32[1,8,128], index: 3, kind: output, shape index: {1}]
  %4 = xla_tuple %s2, %s3
  %s5 = sld [smem:[#allocation0]]
  $region38: #{tpu_custom_call.1} parent=0
    _
  %s7 = ssub.s32 1, %s5
  %s8 = scalar_select 0, %s7, %s5
  $region1: #{tpu_custom_call.1} parent=0
    #allocation4 [shape = 'u8[65536]{0}', space=vmem, size = 0x10000, scoped, tag = 'input window, operand 0, single buffered']
    #allocation5 [shape = 's32[1]{0}', space=sflag, size = 0x4, scoped, tag = 'scoped memory for tpu_custom_call.1']
    #allocation6 [shape = 's32[1]{0}', space=sflag, size = 0x4, scoped, tag = 'scoped memory for tpu_custom_call.1']
    #allocation7 [shape = 'u8[131072]{0}', space=vmem, size = 0x20000, scoped, tag = 'input window, operand 1, single buffered']
    #allocation8 [shape = 's32[1]{0}', space=sflag, size = 0x4, scoped, tag = 'scoped memory for tpu_custom_call.1']
    #allocation9 [shape = 'u8[32768]{0}', space=vmem, size = 0x8000, scoped, tag = 'output window, operand 0, single buffered']
    #allocation10 [shape = 'u8[4096]{0}', space=vmem, size = 0x1000, scoped, tag = 'output window, operand 1, single buffered']
    #allocation11 [shape = 's32[1]{0}', space=sflag, size = 0x4, scoped, tag = 'scoped memory for tpu_custom_call.1']
    %9 = vsyncpa [#allocation5], 0
    %10 = vsyncpa [#allocation8], 0
    %11 = vsyncpa [#allocation6], 0
    %12 = vsyncpa [#allocation11], 0
    // Predicated region
    $region2: #{tpu_custom_call.1} parent=1 // pred_check
      _
    $region3: #{tpu_custom_call.1} parent=1 // pred_check_branch
      %14 = sbr.rel (0) target = $region5
    $region4: #{tpu_custom_call.1} parent=1 // pred_region
      %s16 = ssub.s32 2048, 2048
      %17 = vsyncadd [#allocation5], %s16
      %s18 = sshll.u32 [#allocation4], 4
      %s19 = int_to_ptr.vmem [resolvable:$true] %s18
      %24 = dma.hbm_to_vmem [thread:$0]  %s0, 2048, %s19, [#allocation5], 256, 256, 16
    $region5: #{tpu_custom_call.1} parent=1 // pred_fallthru
      _
    // Predicated region
    $region6: #{tpu_custom_call.1} parent=1 // pred_check
      _
    $region7: #{tpu_custom_call.1} parent=1 // pred_check_branch
      %26 = sbr.rel (0) target = $region9
    $region8: #{tpu_custom_call.1} parent=1 // pred_region
      %s28 = ssub.s32 4096, 4096
      %29 = vsyncadd [#allocation8], %s28
      %s30 = sshll.u32 [#allocation7], 4
      %s31 = int_to_ptr.vmem [resolvable:$true] %s30
      %36 = dma.hbm_to_vmem [thread:$0]  %s1, 4096, %s31, [#allocation8], 256, 256, 16
    $region9: #{tpu_custom_call.1} parent=1 // pred_fallthru
      _
    // Predicated region
    $region10: #{tpu_custom_call.1} parent=1 // pred_check
      _
    $region11: #{tpu_custom_call.1} parent=1 // pred_check_branch
      %38 = sbr.rel (0) target = $region13
    $region12: #{tpu_custom_call.1} parent=1 // pred_region
      %39 = dma.done [#allocation5], 2048
    $region13: #{tpu_custom_call.1} parent=1 // pred_fallthru
      _
    // Predicated region
    $region14: #{tpu_custom_call.1} parent=1 // pred_check
      _
    $region15: #{tpu_custom_call.1} parent=1 // pred_check_branch
      %41 = sbr.rel (0) target = $region17
    $region16: #{tpu_custom_call.1} parent=1 // pred_region
      %42 = dma.done [#allocation8], 4096
    $region17: #{tpu_custom_call.1} parent=1 // pred_fallthru
      _
    %p44 = scmp.eq.s32.totalorder 0, 0
    // Predicated region
    $region18: #{tpu_custom_call.1} parent=1 // pred_check
      %p45 = pneg %p44
    $region19: #{tpu_custom_call.1} parent=1 // pred_check_branch
      %47 = sbr.rel (%p45) target = $region21
    $region20: #{tpu_custom_call.1} parent=1 // pred_region
      %48 = vst [vmem:[#allocation2] sm:$0xff] 0.0
      %49 = vst [vmem:[#allocation3] sm:$0xff] 0.0
    $region21: #{tpu_custom_call.1} parent=1 // pred_fallthru
      _
    %v50 = vld [vmem:[#allocation2] sm:$0xff]
    %v51 = vld [vmem:[#allocation3] sm:$0xff]
    %v52 = vpack.c.bf16 %v50, %v50
    %v53 = vld [vmem:[#allocation7] sm:$0xff]
    %v54 = vld [vmem:[#allocation7 + $0x8] sm:$0xff]
    %v55 = vld [vmem:[#allocation7 + $0x10] sm:$0xff]
    %v56 = vld [vmem:[#allocation7 + $0x18] sm:$0xff]
    %v57 = vld [vmem:[#allocation7 + $0x20] sm:$0xff]
    %v58 = vld [vmem:[#allocation7 + $0x28] sm:$0xff]
    %v59 = vld [vmem:[#allocation7 + $0x30] sm:$0xff]
    %v60 = vld [vmem:[#allocation7 + $0x38] sm:$0xff]
    %v61 = vld [vmem:[#allocation7 + $0x40] sm:$0xff]
    %v62 = vld [vmem:[#allocation7 + $0x48] sm:$0xff]
    %v63 = vld [vmem:[#allocation7 + $0x50] sm:$0xff]
    %v64 = vld [vmem:[#allocation7 + $0x58] sm:$0xff]
    %v65 = vld [vmem:[#allocation7 + $0x60] sm:$0xff]
    %v66 = vld [vmem:[#allocation7 + $0x68] sm:$0xff]
    %v67 = vld [vmem:[#allocation7 + $0x70] sm:$0xff]
    %v68 = vld [vmem:[#allocation7 + $0x78] sm:$0xff]
    %v69 = vld [vmem:[#allocation7 + $0x80] sm:$0xff]
    %v70 = vld [vmem:[#allocation7 + $0x88] sm:$0xff]
    %v71 = vld [vmem:[#allocation7 + $0x90] sm:$0xff]
    %v72 = vld [vmem:[#allocation7 + $0x98] sm:$0xff]
    %v73 = vld [vmem:[#allocation7 + $0xa0] sm:$0xff]
    %v74 = vld [vmem:[#allocation7 + $0xa8] sm:$0xff]
    %v75 = vld [vmem:[#allocation7 + $0xb0] sm:$0xff]
    %v76 = vld [vmem:[#allocation7 + $0xb8] sm:$0xff]
    %v77 = vld [vmem:[#allocation7 + $0xc0] sm:$0xff]
    %v78 = vld [vmem:[#allocation7 + $0xc8] sm:$0xff]
    %v79 = vld [vmem:[#allocation7 + $0xd0] sm:$0xff]
    %v80 = vld [vmem:[#allocation7 + $0xd8] sm:$0xff]
    %v81 = vld [vmem:[#allocation7 + $0xe0] sm:$0xff]
    %v82 = vld [vmem:[#allocation7 + $0xe8] sm:$0xff]
    %v83 = vld [vmem:[#allocation7 + $0xf0] sm:$0xff]
    %v84 = vld [vmem:[#allocation7 + $0xf8] sm:$0xff]
    %v117 = vunpack.c.l.b16 %v53
    %v118 = vunpack.c.h.b16 %v53
    %v119 = vunpack.c.l.b16 %v54
    %v120 = vunpack.c.h.b16 %v54
    %v121 = vunpack.c.l.b16 %v55
    %v122 = vunpack.c.h.b16 %v55
    %v123 = vunpack.c.l.b16 %v56
    %v124 = vunpack.c.h.b16 %v56
    %v125 = vunpack.c.l.b16 %v57
    %v126 = vunpack.c.h.b16 %v57
    %v127 = vunpack.c.l.b16 %v58
    %v128 = vunpack.c.h.b16 %v58
    %v129 = vunpack.c.l.b16 %v59
    %v130 = vunpack.c.h.b16 %v59
    %v131 = vunpack.c.l.b16 %v60
    %v132 = vunpack.c.h.b16 %v60
    %v133 = vunpack.c.l.b16 %v61
    %v134 = vunpack.c.h.b16 %v61
    %v135 = vunpack.c.l.b16 %v62
    %v136 = vunpack.c.h.b16 %v62
    %v137 = vunpack.c.l.b16 %v63
    %v138 = vunpack.c.h.b16 %v63
    %v139 = vunpack.c.l.b16 %v64
    %v140 = vunpack.c.h.b16 %v64
    %v141 = vunpack.c.l.b16 %v65
    %v142 = vunpack.c.h.b16 %v65
    %v143 = vunpack.c.l.b16 %v66
    %v144 = vunpack.c.h.b16 %v66
    %v145 = vunpack.c.l.b16 %v67
    %v146 = vunpack.c.h.b16 %v67
    %v147 = vunpack.c.l.b16 %v68
    %v148 = vunpack.c.h.b16 %v68
    %v149 = vunpack.c.l.b16 %v69
    %v150 = vunpack.c.h.b16 %v69
    %v151 = vunpack.c.l.b16 %v70
    %v152 = vunpack.c.h.b16 %v70
    %v153 = vunpack.c.l.b16 %v71
    %v154 = vunpack.c.h.b16 %v71
    %v155 = vunpack.c.l.b16 %v72
    %v156 = vunpack.c.h.b16 %v72
    %v157 = vunpack.c.l.b16 %v73
    %v158 = vunpack.c.h.b16 %v73
    %v159 = vunpack.c.l.b16 %v74
    %v160 = vunpack.c.h.b16 %v74
    %v161 = vunpack.c.l.b16 %v75
    %v162 = vunpack.c.h.b16 %v75
    %v163 = vunpack.c.l.b16 %v76
    %v164 = vunpack.c.h.b16 %v76
    %v165 = vunpack.c.l.b16 %v77
    %v166 = vunpack.c.h.b16 %v77
    %v167 = vunpack.c.l.b16 %v78
    %v168 = vunpack.c.h.b16 %v78
    %v169 = vunpack.c.l.b16 %v79
    %v170 = vunpack.c.h.b16 %v79
    %v171 = vunpack.c.l.b16 %v80
    %v172 = vunpack.c.h.b16 %v80
    %v173 = vunpack.c.l.b16 %v81
    %v174 = vunpack.c.h.b16 %v81
    %v175 = vunpack.c.l.b16 %v82
    %v176 = vunpack.c.h.b16 %v82
    %v177 = vunpack.c.l.b16 %v83
    %v178 = vunpack.c.h.b16 %v83
    %v179 = vunpack.c.l.b16 %v84
    %v180 = vunpack.c.h.b16 %v84
    %v181 = vpack.c.b16 %v121, %v117
    %v182 = vpack.c.b16 %v122, %v118
    %v183 = vpack.c.b16 %v123, %v119
    %v184 = vpack.c.b16 %v124, %v120
    %v185 = vpack.c.b16 %v129, %v125
    %v186 = vpack.c.b16 %v130, %v126
    %v187 = vpack.c.b16 %v131, %v127
    %v188 = vpack.c.b16 %v132, %v128
    %v189 = vpack.c.b16 %v137, %v133
    %v190 = vpack.c.b16 %v138, %v134
    %v191 = vpack.c.b16 %v139, %v135
    %v192 = vpack.c.b16 %v140, %v136
    %v193 = vpack.c.b16 %v145, %v141
    %v194 = vpack.c.b16 %v146, %v142
    %v195 = vpack.c.b16 %v147, %v143
    %v196 = vpack.c.b16 %v148, %v144
    %v197 = vpack.c.b16 %v153, %v149
    %v198 = vpack.c.b16 %v154, %v150
    %v199 = vpack.c.b16 %v155, %v151
    %v200 = vpack.c.b16 %v156, %v152
    %v201 = vpack.c.b16 %v161, %v157
    %v202 = vpack.c.b16 %v162, %v158
    %v203 = vpack.c.b16 %v163, %v159
    %v204 = vpack.c.b16 %v164, %v160
    %v205 = vpack.c.b16 %v169, %v165
    %v206 = vpack.c.b16 %v170, %v166
    %v207 = vpack.c.b16 %v171, %v167
    %v208 = vpack.c.b16 %v172, %v168
    %v209 = vpack.c.b16 %v177, %v173
    %v210 = vpack.c.b16 %v178, %v174
    %v211 = vpack.c.b16 %v179, %v175
    %v212 = vpack.c.b16 %v180, %v176
    %245 = vmatprep.subr.bf16.mxu0 %v210
    %246 = vmatpush1.bf16.msra.mxu0 %v209
    %247 = vmatprep.subr.bf16.mxu0 %v206
    %248 = vmatpush1.bf16.msra.mxu0 %v205
    %249 = vmatprep.subr.bf16.mxu0 %v202
    %250 = vmatpush1.bf16.msra.mxu0 %v201
    %251 = vmatprep.subr.bf16.mxu0 %v198
    %252 = vmatpush1.bf16.msra.mxu0 %v197
    %253 = vmatprep.subr.bf16.mxu0 %v194
    %254 = vmatpush1.bf16.msra.mxu0 %v193
    %255 = vmatprep.subr.bf16.mxu0 %v190
    %256 = vmatpush1.bf16.msra.mxu0 %v189
    %257 = vmatprep.subr.bf16.mxu0 %v186
    %258 = vmatpush1.bf16.msra.mxu0 %v185
    %259 = vmatprep.subr.bf16.mxu0 %v182
    %260 = vmatpush1.bf16.msra.mxu0 %v181
    %261 = vmatprep.subr.bf16.mxu0 0
    %262 = vmatpush2.bf16.msra.mxu0 0
    %263 = vmatprep.subr.bf16.mxu0 0
    %264 = vmatpush2.bf16.msra.mxu0 0
    %265 = vmatprep.subr.bf16.mxu0 0
    %266 = vmatpush2.bf16.msra.mxu0 0
    %267 = vmatprep.subr.bf16.mxu0 0
    %268 = vmatpush2.bf16.msra.mxu0 0
    %269 = vmatprep.subr.bf16.mxu0 0
    %270 = vmatpush2.bf16.msra.mxu0 0
    %271 = vmatprep.subr.bf16.mxu0 0
    %272 = vmatpush2.bf16.msra.mxu0 0
    %273 = vmatprep.subr.bf16.mxu0 0
    %274 = vmatpush2.bf16.msra.mxu0 0
    %275 = vmatprep.subr.bf16.mxu0 0
    %276 = vmatpush2.bf16.msra.mxu0 0
    %277 = vmatprep.mubr.bf16.mxu0 0
    %278 = vmatmul.mubr.bf16.gmra.mxu0 %v52
    %v279 = vpop.f32.mrf.mxu0
    %v280 = vadd.f32 0.0, %v279
    %v281 = vpop.f32.mrf.mxu0
    %v282 = vadd.f32 0.0, %v281
    %v283 = vpop.f32.mrf.mxu0
    %v284 = vpop.f32.mrf.mxu0
    %285 = vdwg.mxu0
    %286 = vmatprep.subr.bf16.mxu0 %v212
    %287 = vmatpush1.bf16.msra.mxu0 %v211
    %288 = vmatprep.subr.bf16.mxu0 %v208
    %289 = vmatpush1.bf16.msra.mxu0 %v207
    %290 = vmatprep.subr.bf16.mxu0 %v204
    %291 = vmatpush1.bf16.msra.mxu0 %v203
    %292 = vmatprep.subr.bf16.mxu0 %v200
    %293 = vmatpush1.bf16.msra.mxu0 %v199
    %294 = vmatprep.subr.bf16.mxu0 %v196
    %295 = vmatpush1.bf16.msra.mxu0 %v195
    %296 = vmatprep.subr.bf16.mxu0 %v192
    %297 = vmatpush1.bf16.msra.mxu0 %v191
    %298 = vmatprep.subr.bf16.mxu0 %v188
    %299 = vmatpush1.bf16.msra.mxu0 %v187
    %300 = vmatprep.subr.bf16.mxu0 %v184
    %301 = vmatpush1.bf16.msra.mxu0 %v183
    %302 = vmatprep.subr.bf16.mxu0 0
    %303 = vmatpush2.bf16.msra.mxu0 0
    %304 = vmatprep.subr.bf16.mxu0 0
    %305 = vmatpush2.bf16.msra.mxu0 0
    %306 = vmatprep.subr.bf16.mxu0 0
    %307 = vmatpush2.bf16.msra.mxu0 0
    %308 = vmatprep.subr.bf16.mxu0 0
    %309 = vmatpush2.bf16.msra.mxu0 0
    %310 = vmatprep.subr.bf16.mxu0 0
    %311 = vmatpush2.bf16.msra.mxu0 0
    %312 = vmatprep.subr.bf16.mxu0 0
    %313 = vmatpush2.bf16.msra.mxu0 0
    %314 = vmatprep.subr.bf16.mxu0 0
    %315 = vmatpush2.bf16.msra.mxu0 0
    %316 = vmatprep.subr.bf16.mxu0 0
    %317 = vmatpush2.bf16.msra.mxu0 0
    %318 = vmatprep.mubr.bf16.mxu0 0
    %319 = vmatmul.mubr.bf16.gmra.mxu0 %v52
    %v320 = vpop.f32.mrf.mxu0
    %v321 = vadd.f32 0.0, %v320
    %v322 = vpop.f32.mrf.mxu0
    %v323 = vadd.f32 0.0, %v322
    %v324 = vpop.f32.mrf.mxu0
    %v325 = vpop.f32.mrf.mxu0
    %326 = vdwg.mxu0
    %v327 = vld [vmem:[#allocation4] sm:$0xff]
    %v328 = vld [vmem:[#allocation4 + $0x8] sm:$0xff]
    %v329 = vunpack.c.l.bf16 %v327
    %v330 = vunpack.c.h.bf16 %v327
    %v331 = vunpack.c.l.bf16 %v328
    %v332 = vunpack.c.h.bf16 %v328
    %v333 = vadd.f32 %v329, %v280
    %v334 = vadd.f32 %v330, %v282
    %v335 = vadd.f32 %v331, %v321
    %v336 = vadd.f32 %v332, %v323
    %v337 = vmul.f32 %v333, 0.5
    %v338 = vtanh.pop %v337
    %v339 = vadd.f32 %v338, 1.0
    %v340 = vmul.f32 %v339, 0.5
    %v341 = vmul.f32 %v334, 0.5
    %v342 = vtanh.pop %v341
    %v343 = vadd.f32 %v342, 1.0
    %v344 = vmul.f32 %v343, 0.5
    %v345 = vtanh.pop %v335
    %v346 = vmul.f32 %v336, 0.5
    %v347 = vtanh.pop %v346
    %v348 = vadd.f32 %v347, 1.0
    %v349 = vmul.f32 %v348, 0.5
    %v350 = vmul.f32 %v344, %v51
    %v351 = vmul.f32 %v340, %v345
    %v352 = vadd.f32 %v350, %v351
    %v353 = vtanh.pop %v352
    %v354 = vmul.f32 %v349, %v353
    %s355 = smul.u32 0, 8
    %p356 = scmp.lt.s32.totalorder %s355, 8
    %s357 = scalar_select %p356, 1, 0
    %v358 = vstv %s357
    %vm359 = vcmp.eq.s32.totalorder %v358, 1
    %v360 = vsel %vm359, %v354, %v50
    %v361 = vsel %vm359, %v352, %v51
    %362 = vst [vmem:[#allocation9] sm:$0xff] %v360
    %v363 = vpack.c.bf16 %v360, %v360
    %v364 = vld [vmem:[#allocation7] sm:$0xff]
    %v365 = vld [vmem:[#allocation7 + $0x8] sm:$0xff]
    %v366 = vld [vmem:[#allocation7 + $0x10] sm:$0xff]
    %v367 = vld [vmem:[#allocation7 + $0x18] sm:$0xff]
    %v368 = vld [vmem:[#allocation7 + $0x20] sm:$0xff]
    %v369 = vld [vmem:[#allocation7 + $0x28] sm:$0xff]
    %v370 = vld [vmem:[#allocation7 + $0x30] sm:$0xff]
    %v371 = vld [vmem:[#allocation7 + $0x38] sm:$0xff]
    %v372 = vld [vmem:[#allocation7 + $0x40] sm:$0xff]
    %v373 = vld [vmem:[#allocation7 + $0x48] sm:$0xff]
    %v374 = vld [vmem:[#allocation7 + $0x50] sm:$0xff]
    %v375 = vld [vmem:[#allocation7 + $0x58] sm:$0xff]
    %v376 = vld [vmem:[#allocation7 + $0x60] sm:$0xff]
    %v377 = vld [vmem:[#allocation7 + $0x68] sm:$0xff]
    %v378 = vld [vmem:[#allocation7 + $0x70] sm:$0xff]
    %v379 = vld [vmem:[#allocation7 + $0x78] sm:$0xff]
    %v380 = vld [vmem:[#allocation7 + $0x80] sm:$0xff]
    %v381 = vld [vmem:[#allocation7 + $0x88] sm:$0xff]
    %v382 = vld [vmem:[#allocation7 + $0x90] sm:$0xff]
    %v383 = vld [vmem:[#allocation7 + $0x98] sm:$0xff]
    %v384 = vld [vmem:[#allocation7 + $0xa0] sm:$0xff]
    %v385 = vld [vmem:[#allocation7 + $0xa8] sm:$0xff]
    %v386 = vld [vmem:[#allocation7 + $0xb0] sm:$0xff]
    %v387 = vld [vmem:[#allocation7 + $0xb8] sm:$0xff]
    %v388 = vld [vmem:[#allocation7 + $0xc0] sm:$0xff]
    %v389 = vld [vmem:[#allocation7 + $0xc8] sm:$0xff]
    %v390 = vld [vmem:[#allocation7 + $0xd0] sm:$0xff]
    %v391 = vld [vmem:[#allocation7 + $0xd8] sm:$0xff]
    %v392 = vld [vmem:[#allocation7 + $0xe0] sm:$0xff]
    %v393 = vld [vmem:[#allocation7 + $0xe8] sm:$0xff]
    %v394 = vld [vmem:[#allocation7 + $0xf0] sm:$0xff]
    %v395 = vld [vmem:[#allocation7 + $0xf8] sm:$0xff]
    %v428 = vunpack.c.l.b16 %v364
    %v429 = vunpack.c.h.b16 %v364
    %v430 = vunpack.c.l.b16 %v365
    %v431 = vunpack.c.h.b16 %v365
    %v432 = vunpack.c.l.b16 %v366
    %v433 = vunpack.c.h.b16 %v366
    %v434 = vunpack.c.l.b16 %v367
    %v435 = vunpack.c.h.b16 %v367
    %v436 = vunpack.c.l.b16 %v368
    %v437 = vunpack.c.h.b16 %v368
    %v438 = vunpack.c.l.b16 %v369
    %v439 = vunpack.c.h.b16 %v369
    %v440 = vunpack.c.l.b16 %v370
    %v441 = vunpack.c.h.b16 %v370
    %v442 = vunpack.c.l.b16 %v371
    %v443 = vunpack.c.h.b16 %v371
    %v444 = vunpack.c.l.b16 %v372
    %v445 = vunpack.c.h.b16 %v372
    %v446 = vunpack.c.l.b16 %v373
    %v447 = vunpack.c.h.b16 %v373
    %v448 = vunpack.c.l.b16 %v374
    %v449 = vunpack.c.h.b16 %v374
    %v450 = vunpack.c.l.b16 %v375
    %v451 = vunpack.c.h.b16 %v375
    %v452 = vunpack.c.l.b16 %v376
    %v453 = vunpack.c.h.b16 %v376
    %v454 = vunpack.c.l.b16 %v377
    %v455 = vunpack.c.h.b16 %v377
    %v456 = vunpack.c.l.b16 %v378
    %v457 = vunpack.c.h.b16 %v378
    %v458 = vunpack.c.l.b16 %v379
    %v459 = vunpack.c.h.b16 %v379
    %v460 = vunpack.c.l.b16 %v380
    %v461 = vunpack.c.h.b16 %v380
    %v462 = vunpack.c.l.b16 %v381
    %v463 = vunpack.c.h.b16 %v381
    %v464 = vunpack.c.l.b16 %v382
    %v465 = vunpack.c.h.b16 %v382
    %v466 = vunpack.c.l.b16 %v383
    %v467 = vunpack.c.h.b16 %v383
    %v468 = vunpack.c.l.b16 %v384
    %v469 = vunpack.c.h.b16 %v384
    %v470 = vunpack.c.l.b16 %v385
    %v471 = vunpack.c.h.b16 %v385
    %v472 = vunpack.c.l.b16 %v386
    %v473 = vunpack.c.h.b16 %v386
    %v474 = vunpack.c.l.b16 %v387
    %v475 = vunpack.c.h.b16 %v387
    %v476 = vunpack.c.l.b16 %v388
    %v477 = vunpack.c.h.b16 %v388
    %v478 = vunpack.c.l.b16 %v389
    %v479 = vunpack.c.h.b16 %v389
    %v480 = vunpack.c.l.b16 %v390
    %v481 = vunpack.c.h.b16 %v390
    %v482 = vunpack.c.l.b16 %v391
    %v483 = vunpack.c.h.b16 %v391
    %v484 = vunpack.c.l.b16 %v392
    %v485 = vunpack.c.h.b16 %v392
    %v486 = vunpack.c.l.b16 %v393
    %v487 = vunpack.c.h.b16 %v393
    %v488 = vunpack.c.l.b16 %v394
    %v489 = vunpack.c.h.b16 %v394
    %v490 = vunpack.c.l.b16 %v395
    %v491 = vunpack.c.h.b16 %v395
    %v492 = vpack.c.b16 %v432, %v428
    %v493 = vpack.c.b16 %v433, %v429
    %v494 = vpack.c.b16 %v434, %v430
    %v495 = vpack.c.b16 %v435, %v431
    %v496 = vpack.c.b16 %v440, %v436
    %v497 = vpack.c.b16 %v441, %v437
    %v498 = vpack.c.b16 %v442, %v438
    %v499 = vpack.c.b16 %v443, %v439
    %v500 = vpack.c.b16 %v448, %v444
    %v501 = vpack.c.b16 %v449, %v445
    %v502 = vpack.c.b16 %v450, %v446
    %v503 = vpack.c.b16 %v451, %v447
    %v504 = vpack.c.b16 %v456, %v452
    %v505 = vpack.c.b16 %v457, %v453
    %v506 = vpack.c.b16 %v458, %v454
    %v507 = vpack.c.b16 %v459, %v455
    %v508 = vpack.c.b16 %v464, %v460
    %v509 = vpack.c.b16 %v465, %v461
    %v510 = vpack.c.b16 %v466, %v462
    %v511 = vpack.c.b16 %v467, %v463
    %v512 = vpack.c.b16 %v472, %v468
    %v513 = vpack.c.b16 %v473, %v469
    %v514 = vpack.c.b16 %v474, %v470
    %v515 = vpack.c.b16 %v475, %v471
    %v516 = vpack.c.b16 %v480, %v476
    %v517 = vpack.c.b16 %v481, %v477
    %v518 = vpack.c.b16 %v482, %v478
    %v519 = vpack.c.b16 %v483, %v479
    %v520 = vpack.c.b16 %v488, %v484
    %v521 = vpack.c.b16 %v489, %v485
    %v522 = vpack.c.b16 %v490, %v486
    %v523 = vpack.c.b16 %v491, %v487
    %556 = vmatprep.subr.bf16.mxu0 %v521
    %557 = vmatpush1.bf16.msra.mxu0 %v520
    %558 = vmatprep.subr.bf16.mxu0 %v517
    %559 = vmatpush1.bf16.msra.mxu0 %v516
    %560 = vmatprep.subr.bf16.mxu0 %v513
    %561 = vmatpush1.bf16.msra.mxu0 %v512
    %562 = vmatprep.subr.bf16.mxu0 %v509
    %563 = vmatpush1.bf16.msra.mxu0 %v508
    %564 = vmatprep.subr.bf16.mxu0 %v505
    %565 = vmatpush1.bf16.msra.mxu0 %v504
    %566 = vmatprep.subr.bf16.mxu0 %v501
    %567 = vmatpush1.bf16.msra.mxu0 %v500
    %568 = vmatprep.subr.bf16.mxu0 %v497
    %569 = vmatpush1.bf16.msra.mxu0 %v496
    %570 = vmatprep.subr.bf16.mxu0 %v493
    %571 = vmatpush1.bf16.msra.mxu0 %v492
    %572 = vmatprep.subr.bf16.mxu0 0
    %573 = vmatpush2.bf16.msra.mxu0 0
    %574 = vmatprep.subr.bf16.mxu0 0
    %575 = vmatpush2.bf16.msra.mxu0 0
    %576 = vmatprep.subr.bf16.mxu0 0
    %577 = vmatpush2.bf16.msra.mxu0 0
    %578 = vmatprep.subr.bf16.mxu0 0
    %579 = vmatpush2.bf16.msra.mxu0 0
    %580 = vmatprep.subr.bf16.mxu0 0
    %581 = vmatpush2.bf16.msra.mxu0 0
    %582 = vmatprep.subr.bf16.mxu0 0
    %583 = vmatpush2.bf16.msra.mxu0 0
    %584 = vmatprep.subr.bf16.mxu0 0
    %585 = vmatpush2.bf16.msra.mxu0 0
    %586 = vmatprep.subr.bf16.mxu0 0
    %587 = vmatpush2.bf16.msra.mxu0 0
    %588 = vmatprep.mubr.bf16.mxu0 0
    %589 = vmatmul.mubr.bf16.gmra.mxu0 %v363
    %v590 = vpop.f32.mrf.mxu0
    %v591 = vadd.f32 0.0, %v590
    %v592 = vpop.f32.mrf.mxu0
    %v593 = vadd.f32 0.0, %v592
    %v594 = vpop.f32.mrf.mxu0
    %v595 = vpop.f32.mrf.mxu0
    %596 = vdwg.mxu0
    %597 = vmatprep.subr.bf16.mxu0 %v523
    %598 = vmatpush1.bf16.msra.mxu0 %v522
    %599 = vmatprep.subr.bf16.mxu0 %v519
    %600 = vmatpush1.bf16.msra.mxu0 %v518
    %601 = vmatprep.subr.bf16.mxu0 %v515
    %602 = vmatpush1.bf16.msra.mxu0 %v514
    %603 = vmatprep.subr.bf16.mxu0 %v511
    %604 = vmatpush1.bf16.msra.mxu0 %v510
    %605 = vmatprep.subr.bf16.mxu0 %v507
    %606 = vmatpush1.bf16.msra.mxu0 %v506
    %607 = vmatprep.subr.bf16.mxu0 %v503
    %608 = vmatpush1.bf16.msra.mxu0 %v502
    %609 = vmatprep.subr.bf16.mxu0 %v499
    %610 = vmatpush1.bf16.msra.mxu0 %v498
    %611 = vmatprep.subr.bf16.mxu0 %v495
    %612 = vmatpush1.bf16.msra.mxu0 %v494
    %613 = vmatprep.subr.bf16.mxu0 0
    %614 = vmatpush2.bf16.msra.mxu0 0
    %615 = vmatprep.subr.bf16.mxu0 0
    %616 = vmatpush2.bf16.msra.mxu0 0
    %617 = vmatprep.subr.bf16.mxu0 0
    %618 = vmatpush2.bf16.msra.mxu0 0
    %619 = vmatprep.subr.bf16.mxu0 0
    %620 = vmatpush2.bf16.msra.mxu0 0
    %621 = vmatprep.subr.bf16.mxu0 0
    %622 = vmatpush2.bf16.msra.mxu0 0
    %623 = vmatprep.subr.bf16.mxu0 0
    %624 = vmatpush2.bf16.msra.mxu0 0
    %625 = vmatprep.subr.bf16.mxu0 0
    %626 = vmatpush2.bf16.msra.mxu0 0
    %627 = vmatprep.subr.bf16.mxu0 0
    %628 = vmatpush2.bf16.msra.mxu0 0
    %629 = vmatprep.mubr.bf16.mxu0 0
    %630 = vmatmul.mubr.bf16.gmra.mxu0 %v363
    %v631 = vpop.f32.mrf.mxu0
    %v632 = vadd.f32 0.0, %v631
    %v633 = vpop.f32.mrf.mxu0
    %v634 = vadd.f32 0.0, %v633
    %v635 = vpop.f32.mrf.mxu0
    %v636 = vpop.f32.mrf.mxu0
    %637 = vdwg.mxu0
    %s638 = scalar_lea.vmem [#allocation4], 16
    %v639 = vld [vmem:[%s638] sm:$0xff]
    %v640 = vld [vmem:[%s638 + $0x8] sm:$0xff]
    %v641 = vunpack.c.l.bf16 %v639
    %v642 = vunpack.c.h.bf16 %v639
    %v643 = vunpack.c.l.bf16 %v640
    %v644 = vunpack.c.h.bf16 %v640
    %v645 = vadd.f32 %v641, %v591
    %v646 = vadd.f32 %v642, %v593
    %v647 = vadd.f32 %v643, %v632
    %v648 = vadd.f32 %v644, %v634
    %v649 = vmul.f32 %v645, 0.5
    %v650 = vtanh.pop %v649
    %v651 = vadd.f32 %v650, 1.0
    %v652 = vmul.f32 %v651, 0.5
    %v653 = vmul.f32 %v646, 0.5
    %v654 = vtanh.pop %v653
    %v655 = vadd.f32 %v654, 1.0
    %v656 = vmul.f32 %v655, 0.5
    %v657 = vtanh.pop %v647
    %v658 = vmul.f32 %v648, 0.5
    %v659 = vtanh.pop %v658
    %v660 = vadd.f32 %v659, 1.0
    %v661 = vmul.f32 %v660, 0.5
    %v662 = vmul.f32 %v656, %v361
    %v663 = vmul.f32 %v652, %v657
    %v664 = vadd.f32 %v662, %v663
    %v665 = vtanh.pop %v664
    %v666 = vmul.f32 %v661, %v665
    %s667 = sadd.s32 %s355, 1
    %p668 = scmp.lt.s32.totalorder %s667, 8
    %s669 = scalar_select %p668, 1, 0
    %v670 = vstv %s669
    %vm671 = vcmp.eq.s32.totalorder %v670, 1
    %v672 = vsel %vm671, %v666, %v360
    %v673 = vsel %vm671, %v664, %v361
    %s674 = scalar_lea.vmem [#allocation9], 8
    %675 = vst [vmem:[%s674] sm:$0xff] %v672
    %v676 = vpack.c.bf16 %v672, %v672
    %v677 = vld [vmem:[#allocation7] sm:$0xff]
    %v678 = vld [vmem:[#allocation7 + $0x8] sm:$0xff]
    %v679 = vld [vmem:[#allocation7 + $0x10] sm:$0xff]
    %v680 = vld [vmem:[#allocation7 + $0x18] sm:$0xff]
    %v681 = vld [vmem:[#allocation7 + $0x20] sm:$0xff]
    %v682 = vld [vmem:[#allocation7 + $0x28] sm:$0xff]
    %v683 = vld [vmem:[#allocation7 + $0x30] sm:$0xff]
    %v684 = vld [vmem:[#allocation7 + $0x38] sm:$0xff]
    %v685 = vld [vmem:[#allocation7 + $0x40] sm:$0xff]
    %v686 = vld [vmem:[#allocation7 + $0x48] sm:$0xff]
    %v687 = vld [vmem:[#allocation7 + $0x50] sm:$0xff]
    %v688 = vld [vmem:[#allocation7 + $0x58] sm:$0xff]
    %v689 = vld [vmem:[#allocation7 + $0x60] sm:$0xff]
    %v690 = vld [vmem:[#allocation7 + $0x68] sm:$0xff]
    %v691 = vld [vmem:[#allocation7 + $0x70] sm:$0xff]
    %v692 = vld [vmem:[#allocation7 + $0x78] sm:$0xff]
    %v693 = vld [vmem:[#allocation7 + $0x80] sm:$0xff]
    %v694 = vld [vmem:[#allocation7 + $0x88] sm:$0xff]
    %v695 = vld [vmem:[#allocation7 + $0x90] sm:$0xff]
    %v696 = vld [vmem:[#allocation7 + $0x98] sm:$0xff]
    %v697 = vld [vmem:[#allocation7 + $0xa0] sm:$0xff]
    %v698 = vld [vmem:[#allocation7 + $0xa8] sm:$0xff]
    %v699 = vld [vmem:[#allocation7 + $0xb0] sm:$0xff]
    %v700 = vld [vmem:[#allocation7 + $0xb8] sm:$0xff]
    %v701 = vld [vmem:[#allocation7 + $0xc0] sm:$0xff]
    %v702 = vld [vmem:[#allocation7 + $0xc8] sm:$0xff]
    %v703 = vld [vmem:[#allocation7 + $0xd0] sm:$0xff]
    %v704 = vld [vmem:[#allocation7 + $0xd8] sm:$0xff]
    %v705 = vld [vmem:[#allocation7 + $0xe0] sm:$0xff]
    %v706 = vld [vmem:[#allocation7 + $0xe8] sm:$0xff]
    %v707 = vld [vmem:[#allocation7 + $0xf0] sm:$0xff]
    %v708 = vld [vmem:[#allocation7 + $0xf8] sm:$0xff]
    %v741 = vunpack.c.l.b16 %v677
    %v742 = vunpack.c.h.b16 %v677
    %v743 = vunpack.c.l.b16 %v678
    %v744 = vunpack.c.h.b16 %v678
    %v745 = vunpack.c.l.b16 %v679
    %v746 = vunpack.c.h.b16 %v679
    %v747 = vunpack.c.l.b16 %v680
    %v748 = vunpack.c.h.b16 %v680
    %v749 = vunpack.c.l.b16 %v681
    %v750 = vunpack.c.h.b16 %v681
    %v751 = vunpack.c.l.b16 %v682
    %v752 = vunpack.c.h.b16 %v682
    %v753 = vunpack.c.l.b16 %v683
    %v754 = vunpack.c.h.b16 %v683
    %v755 = vunpack.c.l.b16 %v684
    %v756 = vunpack.c.h.b16 %v684
    %v757 = vunpack.c.l.b16 %v685
    %v758 = vunpack.c.h.b16 %v685
    %v759 = vunpack.c.l.b16 %v686
    %v760 = vunpack.c.h.b16 %v686
    %v761 = vunpack.c.l.b16 %v687
    %v762 = vunpack.c.h.b16 %v687
    %v763 = vunpack.c.l.b16 %v688
    %v764 = vunpack.c.h.b16 %v688
    %v765 = vunpack.c.l.b16 %v689
    %v766 = vunpack.c.h.b16 %v689
    %v767 = vunpack.c.l.b16 %v690
    %v768 = vunpack.c.h.b16 %v690
    %v769 = vunpack.c.l.b16 %v691
    %v770 = vunpack.c.h.b16 %v691
    %v771 = vunpack.c.l.b16 %v692
    %v772 = vunpack.c.h.b16 %v692
    %v773 = vunpack.c.l.b16 %v693
    %v774 = vunpack.c.h.b16 %v693
    %v775 = vunpack.c.l.b16 %v694
    %v776 = vunpack.c.h.b16 %v694
    %v777 = vunpack.c.l.b16 %v695
    %v778 = vunpack.c.h.b16 %v695
    %v779 = vunpack.c.l.b16 %v696
    %v780 = vunpack.c.h.b16 %v696
    %v781 = vunpack.c.l.b16 %v697
    %v782 = vunpack.c.h.b16 %v697
    %v783 = vunpack.c.l.b16 %v698
    %v784 = vunpack.c.h.b16 %v698
    %v785 = vunpack.c.l.b16 %v699
    %v786 = vunpack.c.h.b16 %v699
    %v787 = vunpack.c.l.b16 %v700
    %v788 = vunpack.c.h.b16 %v700
    %v789 = vunpack.c.l.b16 %v701
    %v790 = vunpack.c.h.b16 %v701
    %v791 = vunpack.c.l.b16 %v702
    %v792 = vunpack.c.h.b16 %v702
    %v793 = vunpack.c.l.b16 %v703
    %v794 = vunpack.c.h.b16 %v703
    %v795 = vunpack.c.l.b16 %v704
    %v796 = vunpack.c.h.b16 %v704
    %v797 = vunpack.c.l.b16 %v705
    %v798 = vunpack.c.h.b16 %v705
    %v799 = vunpack.c.l.b16 %v706
    %v800 = vunpack.c.h.b16 %v706
    %v801 = vunpack.c.l.b16 %v707
    %v802 = vunpack.c.h.b16 %v707
    %v803 = vunpack.c.l.b16 %v708
    %v804 = vunpack.c.h.b16 %v708
    %v805 = vpack.c.b16 %v745, %v741
    %v806 = vpack.c.b16 %v746, %v742
    %v807 = vpack.c.b16 %v747, %v743
    %v808 = vpack.c.b16 %v748, %v744
    %v809 = vpack.c.b16 %v753, %v749
    %v810 = vpack.c.b16 %v754, %v750
    %v811 = vpack.c.b16 %v755, %v751
    %v812 = vpack.c.b16 %v756, %v752
    %v813 = vpack.c.b16 %v761, %v757
    %v814 = vpack.c.b16 %v762, %v758
    %v815 = vpack.c.b16 %v763, %v759
    %v816 = vpack.c.b16 %v764, %v760
    %v817 = vpack.c.b16 %v769, %v765
    %v818 = vpack.c.b16 %v770, %v766
    %v819 = vpack.c.b16 %v771, %v767
    %v820 = vpack.c.b16 %v772, %v768
    %v821 = vpack.c.b16 %v777, %v773
    %v822 = vpack.c.b16 %v778, %v774
    %v823 = vpack.c.b16 %v779, %v775
    %v824 = vpack.c.b16 %v780, %v776
    %v825 = vpack.c.b16 %v785, %v781
    %v826 = vpack.c.b16 %v786, %v782
    %v827 = vpack.c.b16 %v787, %v783
    %v828 = vpack.c.b16 %v788, %v784
    %v829 = vpack.c.b16 %v793, %v789
    %v830 = vpack.c.b16 %v794, %v790
    %v831 = vpack.c.b16 %v795, %v791
    %v832 = vpack.c.b16 %v796, %v792
    %v833 = vpack.c.b16 %v801, %v797
    %v834 = vpack.c.b16 %v802, %v798
    %v835 = vpack.c.b16 %v803, %v799
    %v836 = vpack.c.b16 %v804, %v800
    %869 = vmatprep.subr.bf16.mxu0 %v834
    %870 = vmatpush1.bf16.msra.mxu0 %v833
    %871 = vmatprep.subr.bf16.mxu0 %v830
    %872 = vmatpush1.bf16.msra.mxu0 %v829
    %873 = vmatprep.subr.bf16.mxu0 %v826
    %874 = vmatpush1.bf16.msra.mxu0 %v825
    %875 = vmatprep.subr.bf16.mxu0 %v822
    %876 = vmatpush1.bf16.msra.mxu0 %v821
    %877 = vmatprep.subr.bf16.mxu0 %v818
    %878 = vmatpush1.bf16.msra.mxu0 %v817
    %879 = vmatprep.subr.bf16.mxu0 %v814
    %880 = vmatpush1.bf16.msra.mxu0 %v813
    %881 = vmatprep.subr.bf16.mxu0 %v810
    %882 = vmatpush1.bf16.msra.mxu0 %v809
    %883 = vmatprep.subr.bf16.mxu0 %v806
    %884 = vmatpush1.bf16.msra.mxu0 %v805
    %885 = vmatprep.subr.bf16.mxu0 0
    %886 = vmatpush2.bf16.msra.mxu0 0
    %887 = vmatprep.subr.bf16.mxu0 0
    %888 = vmatpush2.bf16.msra.mxu0 0
    %889 = vmatprep.subr.bf16.mxu0 0
    %890 = vmatpush2.bf16.msra.mxu0 0
    %891 = vmatprep.subr.bf16.mxu0 0
    %892 = vmatpush2.bf16.msra.mxu0 0
    %893 = vmatprep.subr.bf16.mxu0 0
    %894 = vmatpush2.bf16.msra.mxu0 0
    %895 = vmatprep.subr.bf16.mxu0 0
    %896 = vmatpush2.bf16.msra.mxu0 0
    %897 = vmatprep.subr.bf16.mxu0 0
    %898 = vmatpush2.bf16.msra.mxu0 0
    %899 = vmatprep.subr.bf16.mxu0 0
    %900 = vmatpush2.bf16.msra.mxu0 0
    %901 = vmatprep.mubr.bf16.mxu0 0
    %902 = vmatmul.mubr.bf16.gmra.mxu0 %v676
    %v903 = vpop.f32.mrf.mxu0
    %v904 = vadd.f32 0.0, %v903
    %v905 = vpop.f32.mrf.mxu0
    %v906 = vadd.f32 0.0, %v905
    %v907 = vpop.f32.mrf.mxu0
    %v908 = vpop.f32.mrf.mxu0
    %909 = vdwg.mxu0
    %910 = vmatprep.subr.bf16.mxu0 %v836
    %911 = vmatpush1.bf16.msra.mxu0 %v835
    %912 = vmatprep.subr.bf16.mxu0 %v832
    %913 = vmatpush1.bf16.msra.mxu0 %v831
    %914 = vmatprep.subr.bf16.mxu0 %v828
    %915 = vmatpush1.bf16.msra.mxu0 %v827
    %916 = vmatprep.subr.bf16.mxu0 %v824
    %917 = vmatpush1.bf16.msra.mxu0 %v823
    %918 = vmatprep.subr.bf16.mxu0 %v820
    %919 = vmatpush1.bf16.msra.mxu0 %v819
    %920 = vmatprep.subr.bf16.mxu0 %v816
    %921 = vmatpush1.bf16.msra.mxu0 %v815
    %922 = vmatprep.subr.bf16.mxu0 %v812
    %923 = vmatpush1.bf16.msra.mxu0 %v811
    %924 = vmatprep.subr.bf16.mxu0 %v808
    %925 = vmatpush1.bf16.msra.mxu0 %v807
    %926 = vmatprep.subr.bf16.mxu0 0
    %927 = vmatpush2.bf16.msra.mxu0 0
    %928 = vmatprep.subr.bf16.mxu0 0
    %929 = vmatpush2.bf16.msra.mxu0 0
    %930 = vmatprep.subr.bf16.mxu0 0
    %931 = vmatpush2.bf16.msra.mxu0 0
    %932 = vmatprep.subr.bf16.mxu0 0
    %933 = vmatpush2.bf16.msra.mxu0 0
    %934 = vmatprep.subr.bf16.mxu0 0
    %935 = vmatpush2.bf16.msra.mxu0 0
    %936 = vmatprep.subr.bf16.mxu0 0
    %937 = vmatpush2.bf16.msra.mxu0 0
    %938 = vmatprep.subr.bf16.mxu0 0
    %939 = vmatpush2.bf16.msra.mxu0 0
    %940 = vmatprep.subr.bf16.mxu0 0
    %941 = vmatpush2.bf16.msra.mxu0 0
    %942 = vmatprep.mubr.bf16.mxu0 0
    %943 = vmatmul.mubr.bf16.gmra.mxu0 %v676
    %v944 = vpop.f32.mrf.mxu0
    %v945 = vadd.f32 0.0, %v944
    %v946 = vpop.f32.mrf.mxu0
    %v947 = vadd.f32 0.0, %v946
    %v948 = vpop.f32.mrf.mxu0
    %v949 = vpop.f32.mrf.mxu0
    %950 = vdwg.mxu0
    %s951 = scalar_lea.vmem [#allocation4], 32
    %v952 = vld [vmem:[%s951] sm:$0xff]
    %v953 = vld [vmem:[%s951 + $0x8] sm:$0xff]
    %v954 = vunpack.c.l.bf16 %v952
    %v955 = vunpack.c.h.bf16 %v952
    %v956 = vunpack.c.l.bf16 %v953
    %v957 = vunpack.c.h.bf16 %v953
    %v958 = vadd.f32 %v954, %v904
    %v959 = vadd.f32 %v955, %v906
    %v960 = vadd.f32 %v956, %v945
    %v961 = vadd.f32 %v957, %v947
    %v962 = vmul.f32 %v958, 0.5
    %v963 = vtanh.pop %v962
    %v964 = vadd.f32 %v963, 1.0
    %v965 = vmul.f32 %v964, 0.5
    %v966 = vmul.f32 %v959, 0.5
    %v967 = vtanh.pop %v966
    %v968 = vadd.f32 %v967, 1.0
    %v969 = vmul.f32 %v968, 0.5
    %v970 = vtanh.pop %v960
    %v971 = vmul.f32 %v961, 0.5
    %v972 = vtanh.pop %v971
    %v973 = vadd.f32 %v972, 1.0
    %v974 = vmul.f32 %v973, 0.5
    %v975 = vmul.f32 %v969, %v673
    %v976 = vmul.f32 %v965, %v970
    %v977 = vadd.f32 %v975, %v976
    %v978 = vtanh.pop %v977
    %v979 = vmul.f32 %v974, %v978
    %s980 = sadd.s32 %s355, 2
    %p981 = scmp.lt.s32.totalorder %s980, 8
    %s982 = scalar_select %p981, 1, 0
    %v983 = vstv %s982
    %vm984 = vcmp.eq.s32.totalorder %v983, 1
    %v985 = vsel %vm984, %v979, %v672
    %v986 = vsel %vm984, %v977, %v673
    %s987 = scalar_lea.vmem [#allocation9], 16
    %988 = vst [vmem:[%s987] sm:$0xff] %v985
    %v989 = vpack.c.bf16 %v985, %v985
    %v990 = vld [vmem:[#allocation7] sm:$0xff]
    %v991 = vld [vmem:[#allocation7 + $0x8] sm:$0xff]
    %v992 = vld [vmem:[#allocation7 + $0x10] sm:$0xff]
    %v993 = vld [vmem:[#allocation7 + $0x18] sm:$0xff]
    %v994 = vld [vmem:[#allocation7 + $0x20] sm:$0xff]
    %v995 = vld [vmem:[#allocation7 + $0x28] sm:$0xff]
    %v996 = vld [vmem:[#allocation7 + $0x30] sm:$0xff]
    %v997 = vld [vmem:[#allocation7 + $0x38] sm:$0xff]
    %v998 = vld [vmem:[#allocation7 + $0x40] sm:$0xff]
    %v999 = vld [vmem:[#allocation7 + $0x48] sm:$0xff]
    %v1000 = vld [vmem:[#allocation7 + $0x50] sm:$0xff]
    %v1001 = vld [vmem:[#allocation7 + $0x58] sm:$0xff]
    %v1002 = vld [vmem:[#allocation7 + $0x60] sm:$0xff]
    %v1003 = vld [vmem:[#allocation7 + $0x68] sm:$0xff]
    %v1004 = vld [vmem:[#allocation7 + $0x70] sm:$0xff]
    %v1005 = vld [vmem:[#allocation7 + $0x78] sm:$0xff]
    %v1006 = vld [vmem:[#allocation7 + $0x80] sm:$0xff]
    %v1007 = vld [vmem:[#allocation7 + $0x88] sm:$0xff]
    %v1008 = vld [vmem:[#allocation7 + $0x90] sm:$0xff]
    %v1009 = vld [vmem:[#allocation7 + $0x98] sm:$0xff]
    %v1010 = vld [vmem:[#allocation7 + $0xa0] sm:$0xff]
    %v1011 = vld [vmem:[#allocation7 + $0xa8] sm:$0xff]
    %v1012 = vld [vmem:[#allocation7 + $0xb0] sm:$0xff]
    %v1013 = vld [vmem:[#allocation7 + $0xb8] sm:$0xff]
    %v1014 = vld [vmem:[#allocation7 + $0xc0] sm:$0xff]
    %v1015 = vld [vmem:[#allocation7 + $0xc8] sm:$0xff]
    %v1016 = vld [vmem:[#allocation7 + $0xd0] sm:$0xff]
    %v1017 = vld [vmem:[#allocation7 + $0xd8] sm:$0xff]
    %v1018 = vld [vmem:[#allocation7 + $0xe0] sm:$0xff]
    %v1019 = vld [vmem:[#allocation7 + $0xe8] sm:$0xff]
    %v1020 = vld [vmem:[#allocation7 + $0xf0] sm:$0xff]
    %v1021 = vld [vmem:[#allocation7 + $0xf8] sm:$0xff]
    %v1054 = vunpack.c.l.b16 %v990
    %v1055 = vunpack.c.h.b16 %v990
    %v1056 = vunpack.c.l.b16 %v991
    %v1057 = vunpack.c.h.b16 %v991
    %v1058 = vunpack.c.l.b16 %v992
    %v1059 = vunpack.c.h.b16 %v992
    %v1060 = vunpack.c.l.b16 %v993
    %v1061 = vunpack.c.h.b16 %v993
    %v1062 = vunpack.c.l.b16 %v994
    %v1063 = vunpack.c.h.b16 %v994
    %v1064 = vunpack.c.l.b16 %v995
    %v1065 = vunpack.c.h.b16 %v995
    %v1066 = vunpack.c.l.b16 %v996
    %v1067 = vunpack.c.h.b16 %v996
    %v1068 = vunpack.c.l.b16 %v997
    %v1069 = vunpack.c.h.b16 %v997
    %v1070 = vunpack.c.l.b16 %v998
    %v1071 = vunpack.c.h.b16 %v998
    %v1072 = vunpack.c.l.b16 %v999
    %v1073 = vunpack.c.h.b16 %v999
    %v1074 = vunpack.c.l.b16 %v1000
    %v1075 = vunpack.c.h.b16 %v1000
    %v1076 = vunpack.c.l.b16 %v1001
    %v1077 = vunpack.c.h.b16 %v1001
    %v1078 = vunpack.c.l.b16 %v1002
    %v1079 = vunpack.c.h.b16 %v1002
    %v1080 = vunpack.c.l.b16 %v1003
    %v1081 = vunpack.c.h.b16 %v1003
    %v1082 = vunpack.c.l.b16 %v1004
    %v1083 = vunpack.c.h.b16 %v1004
    %v1084 = vunpack.c.l.b16 %v1005
    %v1085 = vunpack.c.h.b16 %v1005
    %v1086 = vunpack.c.l.b16 %v1006
    %v1087 = vunpack.c.h.b16 %v1006
    %v1088 = vunpack.c.l.b16 %v1007
    %v1089 = vunpack.c.h.b16 %v1007
    %v1090 = vunpack.c.l.b16 %v1008
    %v1091 = vunpack.c.h.b16 %v1008
    %v1092 = vunpack.c.l.b16 %v1009
    %v1093 = vunpack.c.h.b16 %v1009
    %v1094 = vunpack.c.l.b16 %v1010
    %v1095 = vunpack.c.h.b16 %v1010
    %v1096 = vunpack.c.l.b16 %v1011
    %v1097 = vunpack.c.h.b16 %v1011
    %v1098 = vunpack.c.l.b16 %v1012
    %v1099 = vunpack.c.h.b16 %v1012
    %v1100 = vunpack.c.l.b16 %v1013
    %v1101 = vunpack.c.h.b16 %v1013
    %v1102 = vunpack.c.l.b16 %v1014
    %v1103 = vunpack.c.h.b16 %v1014
    %v1104 = vunpack.c.l.b16 %v1015
    %v1105 = vunpack.c.h.b16 %v1015
    %v1106 = vunpack.c.l.b16 %v1016
    %v1107 = vunpack.c.h.b16 %v1016
    %v1108 = vunpack.c.l.b16 %v1017
    %v1109 = vunpack.c.h.b16 %v1017
    %v1110 = vunpack.c.l.b16 %v1018
    %v1111 = vunpack.c.h.b16 %v1018
    %v1112 = vunpack.c.l.b16 %v1019
    %v1113 = vunpack.c.h.b16 %v1019
    %v1114 = vunpack.c.l.b16 %v1020
    %v1115 = vunpack.c.h.b16 %v1020
    %v1116 = vunpack.c.l.b16 %v1021
    %v1117 = vunpack.c.h.b16 %v1021
    %v1118 = vpack.c.b16 %v1058, %v1054
    %v1119 = vpack.c.b16 %v1059, %v1055
    %v1120 = vpack.c.b16 %v1060, %v1056
    %v1121 = vpack.c.b16 %v1061, %v1057
    %v1122 = vpack.c.b16 %v1066, %v1062
    %v1123 = vpack.c.b16 %v1067, %v1063
    %v1124 = vpack.c.b16 %v1068, %v1064
    %v1125 = vpack.c.b16 %v1069, %v1065
    %v1126 = vpack.c.b16 %v1074, %v1070
    %v1127 = vpack.c.b16 %v1075, %v1071
    %v1128 = vpack.c.b16 %v1076, %v1072
    %v1129 = vpack.c.b16 %v1077, %v1073
    %v1130 = vpack.c.b16 %v1082, %v1078
    %v1131 = vpack.c.b16 %v1083, %v1079
    %v1132 = vpack.c.b16 %v1084, %v1080
    %v1133 = vpack.c.b16 %v1085, %v1081
    %v1134 = vpack.c.b16 %v1090, %v1086
    %v1135 = vpack.c.b16 %v1091, %v1087
    %v1136 = vpack.c.b16 %v1092, %v1088
    %v1137 = vpack.c.b16 %v1093, %v1089
    %v1138 = vpack.c.b16 %v1098, %v1094
    %v1139 = vpack.c.b16 %v1099, %v1095
    %v1140 = vpack.c.b16 %v1100, %v1096
    %v1141 = vpack.c.b16 %v1101, %v1097
    %v1142 = vpack.c.b16 %v1106, %v1102
    %v1143 = vpack.c.b16 %v1107, %v1103
    %v1144 = vpack.c.b16 %v1108, %v1104
    %v1145 = vpack.c.b16 %v1109, %v1105
    %v1146 = vpack.c.b16 %v1114, %v1110
    %v1147 = vpack.c.b16 %v1115, %v1111
    %v1148 = vpack.c.b16 %v1116, %v1112
    %v1149 = vpack.c.b16 %v1117, %v1113
    %1182 = vmatprep.subr.bf16.mxu0 %v1147
    %1183 = vmatpush1.bf16.msra.mxu0 %v1146
    %1184 = vmatprep.subr.bf16.mxu0 %v1143
    %1185 = vmatpush1.bf16.msra.mxu0 %v1142
    %1186 = vmatprep.subr.bf16.mxu0 %v1139
    %1187 = vmatpush1.bf16.msra.mxu0 %v1138
    %1188 = vmatprep.subr.bf16.mxu0 %v1135
    %1189 = vmatpush1.bf16.msra.mxu0 %v1134
    %1190 = vmatprep.subr.bf16.mxu0 %v1131
    %1191 = vmatpush1.bf16.msra.mxu0 %v1130
    %1192 = vmatprep.subr.bf16.mxu0 %v1127
    %1193 = vmatpush1.bf16.msra.mxu0 %v1126
    %1194 = vmatprep.subr.bf16.mxu0 %v1123
    %1195 = vmatpush1.bf16.msra.mxu0 %v1122
    %1196 = vmatprep.subr.bf16.mxu0 %v1119
    %1197 = vmatpush1.bf16.msra.mxu0 %v1118
    %1198 = vmatprep.subr.bf16.mxu0 0
    %1199 = vmatpush2.bf16.msra.mxu0 0
    %1200 = vmatprep.subr.bf16.mxu0 0
    %1201 = vmatpush2.bf16.msra.mxu0 0
    %1202 = vmatprep.subr.bf16.mxu0 0
    %1203 = vmatpush2.bf16.msra.mxu0 0
    %1204 = vmatprep.subr.bf16.mxu0 0
    %1205 = vmatpush2.bf16.msra.mxu0 0
    %1206 = vmatprep.subr.bf16.mxu0 0
    %1207 = vmatpush2.bf16.msra.mxu0 0
    %1208 = vmatprep.subr.bf16.mxu0 0
    %1209 = vmatpush2.bf16.msra.mxu0 0
    %1210 = vmatprep.subr.bf16.mxu0 0
    %1211 = vmatpush2.bf16.msra.mxu0 0
    %1212 = vmatprep.subr.bf16.mxu0 0
    %1213 = vmatpush2.bf16.msra.mxu0 0
    %1214 = vmatprep.mubr.bf16.mxu0 0
    %1215 = vmatmul.mubr.bf16.gmra.mxu0 %v989
    %v1216 = vpop.f32.mrf.mxu0
    %v1217 = vadd.f32 0.0, %v1216
    %v1218 = vpop.f32.mrf.mxu0
    %v1219 = vadd.f32 0.0, %v1218
    %v1220 = vpop.f32.mrf.mxu0
    %v1221 = vpop.f32.mrf.mxu0
    %1222 = vdwg.mxu0
    %1223 = vmatprep.subr.bf16.mxu0 %v1149
    %1224 = vmatpush1.bf16.msra.mxu0 %v1148
    %1225 = vmatprep.subr.bf16.mxu0 %v1145
    %1226 = vmatpush1.bf16.msra.mxu0 %v1144
    %1227 = vmatprep.subr.bf16.mxu0 %v1141
    %1228 = vmatpush1.bf16.msra.mxu0 %v1140
    %1229 = vmatprep.subr.bf16.mxu0 %v1137
    %1230 = vmatpush1.bf16.msra.mxu0 %v1136
    %1231 = vmatprep.subr.bf16.mxu0 %v1133
    %1232 = vmatpush1.bf16.msra.mxu0 %v1132
    %1233 = vmatprep.subr.bf16.mxu0 %v1129
    %1234 = vmatpush1.bf16.msra.mxu0 %v1128
    %1235 = vmatprep.subr.bf16.mxu0 %v1125
    %1236 = vmatpush1.bf16.msra.mxu0 %v1124
    %1237 = vmatprep.subr.bf16.mxu0 %v1121
    %1238 = vmatpush1.bf16.msra.mxu0 %v1120
    %1239 = vmatprep.subr.bf16.mxu0 0
    %1240 = vmatpush2.bf16.msra.mxu0 0
    %1241 = vmatprep.subr.bf16.mxu0 0
    %1242 = vmatpush2.bf16.msra.mxu0 0
    %1243 = vmatprep.subr.bf16.mxu0 0
    %1244 = vmatpush2.bf16.msra.mxu0 0
    %1245 = vmatprep.subr.bf16.mxu0 0
    %1246 = vmatpush2.bf16.msra.mxu0 0
    %1247 = vmatprep.subr.bf16.mxu0 0
    %1248 = vmatpush2.bf16.msra.mxu0 0
    %1249 = vmatprep.subr.bf16.mxu0 0
    %1250 = vmatpush2.bf16.msra.mxu0 0
    %1251 = vmatprep.subr.bf16.mxu0 0
    %1252 = vmatpush2.bf16.msra.mxu0 0
    %1253 = vmatprep.subr.bf16.mxu0 0
    %1254 = vmatpush2.bf16.msra.mxu0 0
    %1255 = vmatprep.mubr.bf16.mxu0 0
    %1256 = vmatmul.mubr.bf16.gmra.mxu0 %v989
    %v1257 = vpop.f32.mrf.mxu0
    %v1258 = vadd.f32 0.0, %v1257
    %v1259 = vpop.f32.mrf.mxu0
    %v1260 = vadd.f32 0.0, %v1259
    %v1261 = vpop.f32.mrf.mxu0
    %v1262 = vpop.f32.mrf.mxu0
    %1263 = vdwg.mxu0
    %s1264 = scalar_lea.vmem [#allocation4], 48
    %v1265 = vld [vmem:[%s1264] sm:$0xff]
    %v1266 = vld [vmem:[%s1264 + $0x8] sm:$0xff]
    %v1267 = vunpack.c.l.bf16 %v1265
    %v1268 = vunpack.c.h.bf16 %v1265
    %v1269 = vunpack.c.l.bf16 %v1266
    %v1270 = vunpack.c.h.bf16 %v1266
    %v1271 = vadd.f32 %v1267, %v1217
    %v1272 = vadd.f32 %v1268, %v1219
    %v1273 = vadd.f32 %v1269, %v1258
    %v1274 = vadd.f32 %v1270, %v1260
    %v1275 = vmul.f32 %v1271, 0.5
    %v1276 = vtanh.pop %v1275
    %v1277 = vadd.f32 %v1276, 1.0
    %v1278 = vmul.f32 %v1277, 0.5
    %v1279 = vmul.f32 %v1272, 0.5
    %v1280 = vtanh.pop %v1279
    %v1281 = vadd.f32 %v1280, 1.0
    %v1282 = vmul.f32 %v1281, 0.5
    %v1283 = vtanh.pop %v1273
    %v1284 = vmul.f32 %v1274, 0.5
    %v1285 = vtanh.pop %v1284
    %v1286 = vadd.f32 %v1285, 1.0
    %v1287 = vmul.f32 %v1286, 0.5
    %v1288 = vmul.f32 %v1282, %v986
    %v1289 = vmul.f32 %v1278, %v1283
    %v1290 = vadd.f32 %v1288, %v1289
    %v1291 = vtanh.pop %v1290
    %v1292 = vmul.f32 %v1287, %v1291
    %s1293 = sadd.s32 %s355, 3
    %p1294 = scmp.lt.s32.totalorder %s1293, 8
    %s1295 = scalar_select %p1294, 1, 0
    %v1296 = vstv %s1295
    %vm1297 = vcmp.eq.s32.totalorder %v1296, 1
    %v1298 = vsel %vm1297, %v1292, %v985
    %v1299 = vsel %vm1297, %v1290, %v986
    %s1300 = scalar_lea.vmem [#allocation9], 24
    %1301 = vst [vmem:[%s1300] sm:$0xff] %v1298
    %v1302 = vpack.c.bf16 %v1298, %v1298
    %v1303 = vld [vmem:[#allocation7] sm:$0xff]
    %v1304 = vld [vmem:[#allocation7 + $0x8] sm:$0xff]
    %v1305 = vld [vmem:[#allocation7 + $0x10] sm:$0xff]
    %v1306 = vld [vmem:[#allocation7 + $0x18] sm:$0xff]
    %v1307 = vld [vmem:[#allocation7 + $0x20] sm:$0xff]
    %v1308 = vld [vmem:[#allocation7 + $0x28] sm:$0xff]
    %v1309 = vld [vmem:[#allocation7 + $0x30] sm:$0xff]
    %v1310 = vld [vmem:[#allocation7 + $0x38] sm:$0xff]
    %v1311 = vld [vmem:[#allocation7 + $0x40] sm:$0xff]
    %v1312 = vld [vmem:[#allocation7 + $0x48] sm:$0xff]
    %v1313 = vld [vmem:[#allocation7 + $0x50] sm:$0xff]
    %v1314 = vld [vmem:[#allocation7 + $0x58] sm:$0xff]
    %v1315 = vld [vmem:[#allocation7 + $0x60] sm:$0xff]
    %v1316 = vld [vmem:[#allocation7 + $0x68] sm:$0xff]
    %v1317 = vld [vmem:[#allocation7 + $0x70] sm:$0xff]
    %v1318 = vld [vmem:[#allocation7 + $0x78] sm:$0xff]
    %v1319 = vld [vmem:[#allocation7 + $0x80] sm:$0xff]
    %v1320 = vld [vmem:[#allocation7 + $0x88] sm:$0xff]
    %v1321 = vld [vmem:[#allocation7 + $0x90] sm:$0xff]
    %v1322 = vld [vmem:[#allocation7 + $0x98] sm:$0xff]
    %v1323 = vld [vmem:[#allocation7 + $0xa0] sm:$0xff]
    %v1324 = vld [vmem:[#allocation7 + $0xa8] sm:$0xff]
    %v1325 = vld [vmem:[#allocation7 + $0xb0] sm:$0xff]
    %v1326 = vld [vmem:[#allocation7 + $0xb8] sm:$0xff]
    %v1327 = vld [vmem:[#allocation7 + $0xc0] sm:$0xff]
    %v1328 = vld [vmem:[#allocation7 + $0xc8] sm:$0xff]
    %v1329 = vld [vmem:[#allocation7 + $0xd0] sm:$0xff]
    %v1330 = vld [vmem:[#allocation7 + $0xd8] sm:$0xff]
    %v1331 = vld [vmem:[#allocation7 + $0xe0] sm:$0xff]
    %v1332 = vld [vmem:[#allocation7 + $0xe8] sm:$0xff]
    %v1333 = vld [vmem:[#allocation7 + $0xf0] sm:$0xff]
    %v1334 = vld [vmem:[#allocation7 + $0xf8] sm:$0xff]
    %v1367 = vunpack.c.l.b16 %v1303
    %v1368 = vunpack.c.h.b16 %v1303
    %v1369 = vunpack.c.l.b16 %v1304
    %v1370 = vunpack.c.h.b16 %v1304
    %v1371 = vunpack.c.l.b16 %v1305
    %v1372 = vunpack.c.h.b16 %v1305
    %v1373 = vunpack.c.l.b16 %v1306
    %v1374 = vunpack.c.h.b16 %v1306
    %v1375 = vunpack.c.l.b16 %v1307
    %v1376 = vunpack.c.h.b16 %v1307
    %v1377 = vunpack.c.l.b16 %v1308
    %v1378 = vunpack.c.h.b16 %v1308
    %v1379 = vunpack.c.l.b16 %v1309
    %v1380 = vunpack.c.h.b16 %v1309
    %v1381 = vunpack.c.l.b16 %v1310
    %v1382 = vunpack.c.h.b16 %v1310
    %v1383 = vunpack.c.l.b16 %v1311
    %v1384 = vunpack.c.h.b16 %v1311
    %v1385 = vunpack.c.l.b16 %v1312
    %v1386 = vunpack.c.h.b16 %v1312
    %v1387 = vunpack.c.l.b16 %v1313
    %v1388 = vunpack.c.h.b16 %v1313
    %v1389 = vunpack.c.l.b16 %v1314
    %v1390 = vunpack.c.h.b16 %v1314
    %v1391 = vunpack.c.l.b16 %v1315
    %v1392 = vunpack.c.h.b16 %v1315
    %v1393 = vunpack.c.l.b16 %v1316
    %v1394 = vunpack.c.h.b16 %v1316
    %v1395 = vunpack.c.l.b16 %v1317
    %v1396 = vunpack.c.h.b16 %v1317
    %v1397 = vunpack.c.l.b16 %v1318
    %v1398 = vunpack.c.h.b16 %v1318
    %v1399 = vunpack.c.l.b16 %v1319
    %v1400 = vunpack.c.h.b16 %v1319
    %v1401 = vunpack.c.l.b16 %v1320
    %v1402 = vunpack.c.h.b16 %v1320
    %v1403 = vunpack.c.l.b16 %v1321
    %v1404 = vunpack.c.h.b16 %v1321
    %v1405 = vunpack.c.l.b16 %v1322
    %v1406 = vunpack.c.h.b16 %v1322
    %v1407 = vunpack.c.l.b16 %v1323
    %v1408 = vunpack.c.h.b16 %v1323
    %v1409 = vunpack.c.l.b16 %v1324
    %v1410 = vunpack.c.h.b16 %v1324
    %v1411 = vunpack.c.l.b16 %v1325
    %v1412 = vunpack.c.h.b16 %v1325
    %v1413 = vunpack.c.l.b16 %v1326
    %v1414 = vunpack.c.h.b16 %v1326
    %v1415 = vunpack.c.l.b16 %v1327
    %v1416 = vunpack.c.h.b16 %v1327
    %v1417 = vunpack.c.l.b16 %v1328
    %v1418 = vunpack.c.h.b16 %v1328
    %v1419 = vunpack.c.l.b16 %v1329
    %v1420 = vunpack.c.h.b16 %v1329
    %v1421 = vunpack.c.l.b16 %v1330
    %v1422 = vunpack.c.h.b16 %v1330
    %v1423 = vunpack.c.l.b16 %v1331
    %v1424 = vunpack.c.h.b16 %v1331
    %v1425 = vunpack.c.l.b16 %v1332
    %v1426 = vunpack.c.h.b16 %v1332
    %v1427 = vunpack.c.l.b16 %v1333
    %v1428 = vunpack.c.h.b16 %v1333
    %v1429 = vunpack.c.l.b16 %v1334
    %v1430 = vunpack.c.h.b16 %v1334
    %v1431 = vpack.c.b16 %v1371, %v1367
    %v1432 = vpack.c.b16 %v1372, %v1368
    %v1433 = vpack.c.b16 %v1373, %v1369
    %v1434 = vpack.c.b16 %v1374, %v1370
    %v1435 = vpack.c.b16 %v1379, %v1375
    %v1436 = vpack.c.b16 %v1380, %v1376
    %v1437 = vpack.c.b16 %v1381, %v1377
    %v1438 = vpack.c.b16 %v1382, %v1378
    %v1439 = vpack.c.b16 %v1387, %v1383
    %v1440 = vpack.c.b16 %v1388, %v1384
    %v1441 = vpack.c.b16 %v1389, %v1385
    %v1442 = vpack.c.b16 %v1390, %v1386
    %v1443 = vpack.c.b16 %v1395, %v1391
    %v1444 = vpack.c.b16 %v1396, %v1392
    %v1445 = vpack.c.b16 %v1397, %v1393
    %v1446 = vpack.c.b16 %v1398, %v1394
    %v1447 = vpack.c.b16 %v1403, %v1399
    %v1448 = vpack.c.b16 %v1404, %v1400
    %v1449 = vpack.c.b16 %v1405, %v1401
    %v1450 = vpack.c.b16 %v1406, %v1402
    %v1451 = vpack.c.b16 %v1411, %v1407
    %v1452 = vpack.c.b16 %v1412, %v1408
    %v1453 = vpack.c.b16 %v1413, %v1409
    %v1454 = vpack.c.b16 %v1414, %v1410
    %v1455 = vpack.c.b16 %v1419, %v1415
    %v1456 = vpack.c.b16 %v1420, %v1416
    %v1457 = vpack.c.b16 %v1421, %v1417
    %v1458 = vpack.c.b16 %v1422, %v1418
    %v1459 = vpack.c.b16 %v1427, %v1423
    %v1460 = vpack.c.b16 %v1428, %v1424
    %v1461 = vpack.c.b16 %v1429, %v1425
    %v1462 = vpack.c.b16 %v1430, %v1426
    %1495 = vmatprep.subr.bf16.mxu0 %v1460
    %1496 = vmatpush1.bf16.msra.mxu0 %v1459
    %1497 = vmatprep.subr.bf16.mxu0 %v1456
    %1498 = vmatpush1.bf16.msra.mxu0 %v1455
    %1499 = vmatprep.subr.bf16.mxu0 %v1452
    %1500 = vmatpush1.bf16.msra.mxu0 %v1451
    %1501 = vmatprep.subr.bf16.mxu0 %v1448
    %1502 = vmatpush1.bf16.msra.mxu0 %v1447
    %1503 = vmatprep.subr.bf16.mxu0 %v1444
    %1504 = vmatpush1.bf16.msra.mxu0 %v1443
    %1505 = vmatprep.subr.bf16.mxu0 %v1440
    %1506 = vmatpush1.bf16.msra.mxu0 %v1439
    %1507 = vmatprep.subr.bf16.mxu0 %v1436
    %1508 = vmatpush1.bf16.msra.mxu0 %v1435
    %1509 = vmatprep.subr.bf16.mxu0 %v1432
    %1510 = vmatpush1.bf16.msra.mxu0 %v1431
    %1511 = vmatprep.subr.bf16.mxu0 0
    %1512 = vmatpush2.bf16.msra.mxu0 0
    %1513 = vmatprep.subr.bf16.mxu0 0
    %1514 = vmatpush2.bf16.msra.mxu0 0
    %1515 = vmatprep.subr.bf16.mxu0 0
    %1516 = vmatpush2.bf16.msra.mxu0 0
    %1517 = vmatprep.subr.bf16.mxu0 0
    %1518 = vmatpush2.bf16.msra.mxu0 0
    %1519 = vmatprep.subr.bf16.mxu0 0
    %1520 = vmatpush2.bf16.msra.mxu0 0
    %1521 = vmatprep.subr.bf16.mxu0 0
    %1522 = vmatpush2.bf16.msra.mxu0 0
    %1523 = vmatprep.subr.bf16.mxu0 0
    %1524 = vmatpush2.bf16.msra.mxu0 0
    %1525 = vmatprep.subr.bf16.mxu0 0
    %1526 = vmatpush2.bf16.msra.mxu0 0
    %1527 = vmatprep.mubr.bf16.mxu0 0
    %1528 = vmatmul.mubr.bf16.gmra.mxu0 %v1302
    %v1529 = vpop.f32.mrf.mxu0
    %v1530 = vadd.f32 0.0, %v1529
    %v1531 = vpop.f32.mrf.mxu0
    %v1532 = vadd.f32 0.0, %v1531
    %v1533 = vpop.f32.mrf.mxu0
    %v1534 = vpop.f32.mrf.mxu0
    %1535 = vdwg.mxu0
    %1536 = vmatprep.subr.bf16.mxu0 %v1462
    %1537 = vmatpush1.bf16.msra.mxu0 %v1461
    %1538 = vmatprep.subr.bf16.mxu0 %v1458
    %1539 = vmatpush1.bf16.msra.mxu0 %v1457
    %1540 = vmatprep.subr.bf16.mxu0 %v1454
    %1541 = vmatpush1.bf16.msra.mxu0 %v1453
    %1542 = vmatprep.subr.bf16.mxu0 %v1450
    %1543 = vmatpush1.bf16.msra.mxu0 %v1449
    %1544 = vmatprep.subr.bf16.mxu0 %v1446
    %1545 = vmatpush1.bf16.msra.mxu0 %v1445
    %1546 = vmatprep.subr.bf16.mxu0 %v1442
    %1547 = vmatpush1.bf16.msra.mxu0 %v1441
    %1548 = vmatprep.subr.bf16.mxu0 %v1438
    %1549 = vmatpush1.bf16.msra.mxu0 %v1437
    %1550 = vmatprep.subr.bf16.mxu0 %v1434
    %1551 = vmatpush1.bf16.msra.mxu0 %v1433
    %1552 = vmatprep.subr.bf16.mxu0 0
    %1553 = vmatpush2.bf16.msra.mxu0 0
    %1554 = vmatprep.subr.bf16.mxu0 0
    %1555 = vmatpush2.bf16.msra.mxu0 0
    %1556 = vmatprep.subr.bf16.mxu0 0
    %1557 = vmatpush2.bf16.msra.mxu0 0
    %1558 = vmatprep.subr.bf16.mxu0 0
    %1559 = vmatpush2.bf16.msra.mxu0 0
    %1560 = vmatprep.subr.bf16.mxu0 0
    %1561 = vmatpush2.bf16.msra.mxu0 0
    %1562 = vmatprep.subr.bf16.mxu0 0
    %1563 = vmatpush2.bf16.msra.mxu0 0
    %1564 = vmatprep.subr.bf16.mxu0 0
    %1565 = vmatpush2.bf16.msra.mxu0 0
    %1566 = vmatprep.subr.bf16.mxu0 0
    %1567 = vmatpush2.bf16.msra.mxu0 0
    %1568 = vmatprep.mubr.bf16.mxu0 0
    %1569 = vmatmul.mubr.bf16.gmra.mxu0 %v1302
    %v1570 = vpop.f32.mrf.mxu0
    %v1571 = vadd.f32 0.0, %v1570
    %v1572 = vpop.f32.mrf.mxu0
    %v1573 = vadd.f32 0.0, %v1572
    %v1574 = vpop.f32.mrf.mxu0
    %v1575 = vpop.f32.mrf.mxu0
    %1576 = vdwg.mxu0
    %s1577 = scalar_lea.vmem [#allocation4], 64
    %v1578 = vld [vmem:[%s1577] sm:$0xff]
    %v1579 = vld [vmem:[%s1577 + $0x8] sm:$0xff]
    %v1580 = vunpack.c.l.bf16 %v1578
    %v1581 = vunpack.c.h.bf16 %v1578
    %v1582 = vunpack.c.l.bf16 %v1579
    %v1583 = vunpack.c.h.bf16 %v1579
    %v1584 = vadd.f32 %v1580, %v1530
    %v1585 = vadd.f32 %v1581, %v1532
    %v1586 = vadd.f32 %v1582, %v1571
    %v1587 = vadd.f32 %v1583, %v1573
    %v1588 = vmul.f32 %v1584, 0.5
    %v1589 = vtanh.pop %v1588
    %v1590 = vadd.f32 %v1589, 1.0
    %v1591 = vmul.f32 %v1590, 0.5
    %v1592 = vmul.f32 %v1585, 0.5
    %v1593 = vtanh.pop %v1592
    %v1594 = vadd.f32 %v1593, 1.0
    %v1595 = vmul.f32 %v1594, 0.5
    %v1596 = vtanh.pop %v1586
    %v1597 = vmul.f32 %v1587, 0.5
    %v1598 = vtanh.pop %v1597
    %v1599 = vadd.f32 %v1598, 1.0
    %v1600 = vmul.f32 %v1599, 0.5
    %v1601 = vmul.f32 %v1595, %v1299
    %v1602 = vmul.f32 %v1591, %v1596
    %v1603 = vadd.f32 %v1601, %v1602
    %v1604 = vtanh.pop %v1603
    %v1605 = vmul.f32 %v1600, %v1604
    %s1606 = sadd.s32 %s355, 4
    %p1607 = scmp.lt.s32.totalorder %s1606, 8
    %s1608 = scalar_select %p1607, 1, 0
    %v1609 = vstv %s1608
    %vm1610 = vcmp.eq.s32.totalorder %v1609, 1
    %v1611 = vsel %vm1610, %v1605, %v1298
    %v1612 = vsel %vm1610, %v1603, %v1299
    %s1613 = scalar_lea.vmem [#allocation9], 32
    %1614 = vst [vmem:[%s1613] sm:$0xff] %v1611
    %v1615 = vpack.c.bf16 %v1611, %v1611
    %v1616 = vld [vmem:[#allocation7] sm:$0xff]
    %v1617 = vld [vmem:[#allocation7 + $0x8] sm:$0xff]
    %v1618 = vld [vmem:[#allocation7 + $0x10] sm:$0xff]
    %v1619 = vld [vmem:[#allocation7 + $0x18] sm:$0xff]
    %v1620 = vld [vmem:[#allocation7 + $0x20] sm:$0xff]
    %v1621 = vld [vmem:[#allocation7 + $0x28] sm:$0xff]
    %v1622 = vld [vmem:[#allocation7 + $0x30] sm:$0xff]
    %v1623 = vld [vmem:[#allocation7 + $0x38] sm:$0xff]
    %v1624 = vld [vmem:[#allocation7 + $0x40] sm:$0xff]
    %v1625 = vld [vmem:[#allocation7 + $0x48] sm:$0xff]
    %v1626 = vld [vmem:[#allocation7 + $0x50] sm:$0xff]
    %v1627 = vld [vmem:[#allocation7 + $0x58] sm:$0xff]
    %v1628 = vld [vmem:[#allocation7 + $0x60] sm:$0xff]
    %v1629 = vld [vmem:[#allocation7 + $0x68] sm:$0xff]
    %v1630 = vld [vmem:[#allocation7 + $0x70] sm:$0xff]
    %v1631 = vld [vmem:[#allocation7 + $0x78] sm:$0xff]
    %v1632 = vld [vmem:[#allocation7 + $0x80] sm:$0xff]
    %v1633 = vld [vmem:[#allocation7 + $0x88] sm:$0xff]
    %v1634 = vld [vmem:[#allocation7 + $0x90] sm:$0xff]
    %v1635 = vld [vmem:[#allocation7 + $0x98] sm:$0xff]
    %v1636 = vld [vmem:[#allocation7 + $0xa0] sm:$0xff]
    %v1637 = vld [vmem:[#allocation7 + $0xa8] sm:$0xff]
    %v1638 = vld [vmem:[#allocation7 + $0xb0] sm:$0xff]
    %v1639 = vld [vmem:[#allocation7 + $0xb8] sm:$0xff]
    %v1640 = vld [vmem:[#allocation7 + $0xc0] sm:$0xff]
    %v1641 = vld [vmem:[#allocation7 + $0xc8] sm:$0xff]
    %v1642 = vld [vmem:[#allocation7 + $0xd0] sm:$0xff]
    %v1643 = vld [vmem:[#allocation7 + $0xd8] sm:$0xff]
    %v1644 = vld [vmem:[#allocation7 + $0xe0] sm:$0xff]
    %v1645 = vld [vmem:[#allocation7 + $0xe8] sm:$0xff]
    %v1646 = vld [vmem:[#allocation7 + $0xf0] sm:$0xff]
    %v1647 = vld [vmem:[#allocation7 + $0xf8] sm:$0xff]
    %v1680 = vunpack.c.l.b16 %v1616
    %v1681 = vunpack.c.h.b16 %v1616
    %v1682 = vunpack.c.l.b16 %v1617
    %v1683 = vunpack.c.h.b16 %v1617
    %v1684 = vunpack.c.l.b16 %v1618
    %v1685 = vunpack.c.h.b16 %v1618
    %v1686 = vunpack.c.l.b16 %v1619
    %v1687 = vunpack.c.h.b16 %v1619
    %v1688 = vunpack.c.l.b16 %v1620
    %v1689 = vunpack.c.h.b16 %v1620
    %v1690 = vunpack.c.l.b16 %v1621
    %v1691 = vunpack.c.h.b16 %v1621
    %v1692 = vunpack.c.l.b16 %v1622
    %v1693 = vunpack.c.h.b16 %v1622
    %v1694 = vunpack.c.l.b16 %v1623
    %v1695 = vunpack.c.h.b16 %v1623
    %v1696 = vunpack.c.l.b16 %v1624
    %v1697 = vunpack.c.h.b16 %v1624
    %v1698 = vunpack.c.l.b16 %v1625
    %v1699 = vunpack.c.h.b16 %v1625
    %v1700 = vunpack.c.l.b16 %v1626
    %v1701 = vunpack.c.h.b16 %v1626
    %v1702 = vunpack.c.l.b16 %v1627
    %v1703 = vunpack.c.h.b16 %v1627
    %v1704 = vunpack.c.l.b16 %v1628
    %v1705 = vunpack.c.h.b16 %v1628
    %v1706 = vunpack.c.l.b16 %v1629
    %v1707 = vunpack.c.h.b16 %v1629
    %v1708 = vunpack.c.l.b16 %v1630
    %v1709 = vunpack.c.h.b16 %v1630
    %v1710 = vunpack.c.l.b16 %v1631
    %v1711 = vunpack.c.h.b16 %v1631
    %v1712 = vunpack.c.l.b16 %v1632
    %v1713 = vunpack.c.h.b16 %v1632
    %v1714 = vunpack.c.l.b16 %v1633
    %v1715 = vunpack.c.h.b16 %v1633
    %v1716 = vunpack.c.l.b16 %v1634
    %v1717 = vunpack.c.h.b16 %v1634
    %v1718 = vunpack.c.l.b16 %v1635
    %v1719 = vunpack.c.h.b16 %v1635
    %v1720 = vunpack.c.l.b16 %v1636
    %v1721 = vunpack.c.h.b16 %v1636
    %v1722 = vunpack.c.l.b16 %v1637
    %v1723 = vunpack.c.h.b16 %v1637
    %v1724 = vunpack.c.l.b16 %v1638
    %v1725 = vunpack.c.h.b16 %v1638
    %v1726 = vunpack.c.l.b16 %v1639
    %v1727 = vunpack.c.h.b16 %v1639
    %v1728 = vunpack.c.l.b16 %v1640
    %v1729 = vunpack.c.h.b16 %v1640
    %v1730 = vunpack.c.l.b16 %v1641
    %v1731 = vunpack.c.h.b16 %v1641
    %v1732 = vunpack.c.l.b16 %v1642
    %v1733 = vunpack.c.h.b16 %v1642
    %v1734 = vunpack.c.l.b16 %v1643
    %v1735 = vunpack.c.h.b16 %v1643
    %v1736 = vunpack.c.l.b16 %v1644
    %v1737 = vunpack.c.h.b16 %v1644
    %v1738 = vunpack.c.l.b16 %v1645
    %v1739 = vunpack.c.h.b16 %v1645
    %v1740 = vunpack.c.l.b16 %v1646
    %v1741 = vunpack.c.h.b16 %v1646
    %v1742 = vunpack.c.l.b16 %v1647
    %v1743 = vunpack.c.h.b16 %v1647
    %v1744 = vpack.c.b16 %v1684, %v1680
    %v1745 = vpack.c.b16 %v1685, %v1681
    %v1746 = vpack.c.b16 %v1686, %v1682
    %v1747 = vpack.c.b16 %v1687, %v1683
    %v1748 = vpack.c.b16 %v1692, %v1688
    %v1749 = vpack.c.b16 %v1693, %v1689
    %v1750 = vpack.c.b16 %v1694, %v1690
    %v1751 = vpack.c.b16 %v1695, %v1691
    %v1752 = vpack.c.b16 %v1700, %v1696
    %v1753 = vpack.c.b16 %v1701, %v1697
    %v1754 = vpack.c.b16 %v1702, %v1698
    %v1755 = vpack.c.b16 %v1703, %v1699
    %v1756 = vpack.c.b16 %v1708, %v1704
    %v1757 = vpack.c.b16 %v1709, %v1705
    %v1758 = vpack.c.b16 %v1710, %v1706
    %v1759 = vpack.c.b16 %v1711, %v1707
    %v1760 = vpack.c.b16 %v1716, %v1712
    %v1761 = vpack.c.b16 %v1717, %v1713
    %v1762 = vpack.c.b16 %v1718, %v1714
    %v1763 = vpack.c.b16 %v1719, %v1715
    %v1764 = vpack.c.b16 %v1724, %v1720
    %v1765 = vpack.c.b16 %v1725, %v1721
    %v1766 = vpack.c.b16 %v1726, %v1722
    %v1767 = vpack.c.b16 %v1727, %v1723
    %v1768 = vpack.c.b16 %v1732, %v1728
    %v1769 = vpack.c.b16 %v1733, %v1729
    %v1770 = vpack.c.b16 %v1734, %v1730
    %v1771 = vpack.c.b16 %v1735, %v1731
    %v1772 = vpack.c.b16 %v1740, %v1736
    %v1773 = vpack.c.b16 %v1741, %v1737
    %v1774 = vpack.c.b16 %v1742, %v1738
    %v1775 = vpack.c.b16 %v1743, %v1739
    %1808 = vmatprep.subr.bf16.mxu0 %v1773
    %1809 = vmatpush1.bf16.msra.mxu0 %v1772
    %1810 = vmatprep.subr.bf16.mxu0 %v1769
    %1811 = vmatpush1.bf16.msra.mxu0 %v1768
    %1812 = vmatprep.subr.bf16.mxu0 %v1765
    %1813 = vmatpush1.bf16.msra.mxu0 %v1764
    %1814 = vmatprep.subr.bf16.mxu0 %v1761
    %1815 = vmatpush1.bf16.msra.mxu0 %v1760
    %1816 = vmatprep.subr.bf16.mxu0 %v1757
    %1817 = vmatpush1.bf16.msra.mxu0 %v1756
    %1818 = vmatprep.subr.bf16.mxu0 %v1753
    %1819 = vmatpush1.bf16.msra.mxu0 %v1752
    %1820 = vmatprep.subr.bf16.mxu0 %v1749
    %1821 = vmatpush1.bf16.msra.mxu0 %v1748
    %1822 = vmatprep.subr.bf16.mxu0 %v1745
    %1823 = vmatpush1.bf16.msra.mxu0 %v1744
    %1824 = vmatprep.subr.bf16.mxu0 0
    %1825 = vmatpush2.bf16.msra.mxu0 0
    %1826 = vmatprep.subr.bf16.mxu0 0
    %1827 = vmatpush2.bf16.msra.mxu0 0
    %1828 = vmatprep.subr.bf16.mxu0 0
    %1829 = vmatpush2.bf16.msra.mxu0 0
    %1830 = vmatprep.subr.bf16.mxu0 0
    %1831 = vmatpush2.bf16.msra.mxu0 0
    %1832 = vmatprep.subr.bf16.mxu0 0
    %1833 = vmatpush2.bf16.msra.mxu0 0
    %1834 = vmatprep.subr.bf16.mxu0 0
    %1835 = vmatpush2.bf16.msra.mxu0 0
    %1836 = vmatprep.subr.bf16.mxu0 0
    %1837 = vmatpush2.bf16.msra.mxu0 0
    %1838 = vmatprep.subr.bf16.mxu0 0
    %1839 = vmatpush2.bf16.msra.mxu0 0
    %1840 = vmatprep.mubr.bf16.mxu0 0
    %1841 = vmatmul.mubr.bf16.gmra.mxu0 %v1615
    %v1842 = vpop.f32.mrf.mxu0
    %v1843 = vadd.f32 0.0, %v1842
    %v1844 = vpop.f32.mrf.mxu0
    %v1845 = vadd.f32 0.0, %v1844
    %v1846 = vpop.f32.mrf.mxu0
    %v1847 = vpop.f32.mrf.mxu0
    %1848 = vdwg.mxu0
    %1849 = vmatprep.subr.bf16.mxu0 %v1775
    %1850 = vmatpush1.bf16.msra.mxu0 %v1774
    %1851 = vmatprep.subr.bf16.mxu0 %v1771
    %1852 = vmatpush1.bf16.msra.mxu0 %v1770
    %1853 = vmatprep.subr.bf16.mxu0 %v1767
    %1854 = vmatpush1.bf16.msra.mxu0 %v1766
    %1855 = vmatprep.subr.bf16.mxu0 %v1763
    %1856 = vmatpush1.bf16.msra.mxu0 %v1762
    %1857 = vmatprep.subr.bf16.mxu0 %v1759
    %1858 = vmatpush1.bf16.msra.mxu0 %v1758
    %1859 = vmatprep.subr.bf16.mxu0 %v1755
    %1860 = vmatpush1.bf16.msra.mxu0 %v1754
    %1861 = vmatprep.subr.bf16.mxu0 %v1751
    %1862 = vmatpush1.bf16.msra.mxu0 %v1750
    %1863 = vmatprep.subr.bf16.mxu0 %v1747
    %1864 = vmatpush1.bf16.msra.mxu0 %v1746
    %1865 = vmatprep.subr.bf16.mxu0 0
    %1866 = vmatpush2.bf16.msra.mxu0 0
    %1867 = vmatprep.subr.bf16.mxu0 0
    %1868 = vmatpush2.bf16.msra.mxu0 0
    %1869 = vmatprep.subr.bf16.mxu0 0
    %1870 = vmatpush2.bf16.msra.mxu0 0
    %1871 = vmatprep.subr.bf16.mxu0 0
    %1872 = vmatpush2.bf16.msra.mxu0 0
    %1873 = vmatprep.subr.bf16.mxu0 0
    %1874 = vmatpush2.bf16.msra.mxu0 0
    %1875 = vmatprep.subr.bf16.mxu0 0
    %1876 = vmatpush2.bf16.msra.mxu0 0
    %1877 = vmatprep.subr.bf16.mxu0 0
    %1878 = vmatpush2.bf16.msra.mxu0 0
    %1879 = vmatprep.subr.bf16.mxu0 0
    %1880 = vmatpush2.bf16.msra.mxu0 0
    %1881 = vmatprep.mubr.bf16.mxu0 0
    %1882 = vmatmul.mubr.bf16.gmra.mxu0 %v1615
    %v1883 = vpop.f32.mrf.mxu0
    %v1884 = vadd.f32 0.0, %v1883
    %v1885 = vpop.f32.mrf.mxu0
    %v1886 = vadd.f32 0.0, %v1885
    %v1887 = vpop.f32.mrf.mxu0
    %v1888 = vpop.f32.mrf.mxu0
    %1889 = vdwg.mxu0
    %s1890 = scalar_lea.vmem [#allocation4], 80
    %v1891 = vld [vmem:[%s1890] sm:$0xff]
    %v1892 = vld [vmem:[%s1890 + $0x8] sm:$0xff]
    %v1893 = vunpack.c.l.bf16 %v1891
    %v1894 = vunpack.c.h.bf16 %v1891
    %v1895 = vunpack.c.l.bf16 %v1892
    %v1896 = vunpack.c.h.bf16 %v1892
    %v1897 = vadd.f32 %v1893, %v1843
    %v1898 = vadd.f32 %v1894, %v1845
    %v1899 = vadd.f32 %v1895, %v1884
    %v1900 = vadd.f32 %v1896, %v1886
    %v1901 = vmul.f32 %v1897, 0.5
    %v1902 = vtanh.pop %v1901
    %v1903 = vadd.f32 %v1902, 1.0
    %v1904 = vmul.f32 %v1903, 0.5
    %v1905 = vmul.f32 %v1898, 0.5
    %v1906 = vtanh.pop %v1905
    %v1907 = vadd.f32 %v1906, 1.0
    %v1908 = vmul.f32 %v1907, 0.5
    %v1909 = vtanh.pop %v1899
    %v1910 = vmul.f32 %v1900, 0.5
    %v1911 = vtanh.pop %v1910
    %v1912 = vadd.f32 %v1911, 1.0
    %v1913 = vmul.f32 %v1912, 0.5
    %v1914 = vmul.f32 %v1908, %v1612
    %v1915 = vmul.f32 %v1904, %v1909
    %v1916 = vadd.f32 %v1914, %v1915
    %v1917 = vtanh.pop %v1916
    %v1918 = vmul.f32 %v1913, %v1917
    %s1919 = sadd.s32 %s355, 5
    %p1920 = scmp.lt.s32.totalorder %s1919, 8
    %s1921 = scalar_select %p1920, 1, 0
    %v1922 = vstv %s1921
    %vm1923 = vcmp.eq.s32.totalorder %v1922, 1
    %v1924 = vsel %vm1923, %v1918, %v1611
    %v1925 = vsel %vm1923, %v1916, %v1612
    %s1926 = scalar_lea.vmem [#allocation9], 40
    %1927 = vst [vmem:[%s1926] sm:$0xff] %v1924
    %v1928 = vpack.c.bf16 %v1924, %v1924
    %v1929 = vld [vmem:[#allocation7] sm:$0xff]
    %v1930 = vld [vmem:[#allocation7 + $0x8] sm:$0xff]
    %v1931 = vld [vmem:[#allocation7 + $0x10] sm:$0xff]
    %v1932 = vld [vmem:[#allocation7 + $0x18] sm:$0xff]
    %v1933 = vld [vmem:[#allocation7 + $0x20] sm:$0xff]
    %v1934 = vld [vmem:[#allocation7 + $0x28] sm:$0xff]
    %v1935 = vld [vmem:[#allocation7 + $0x30] sm:$0xff]
    %v1936 = vld [vmem:[#allocation7 + $0x38] sm:$0xff]
    %v1937 = vld [vmem:[#allocation7 + $0x40] sm:$0xff]
    %v1938 = vld [vmem:[#allocation7 + $0x48] sm:$0xff]
    %v1939 = vld [vmem:[#allocation7 + $0x50] sm:$0xff]
    %v1940 = vld [vmem:[#allocation7 + $0x58] sm:$0xff]
    %v1941 = vld [vmem:[#allocation7 + $0x60] sm:$0xff]
    %v1942 = vld [vmem:[#allocation7 + $0x68] sm:$0xff]
    %v1943 = vld [vmem:[#allocation7 + $0x70] sm:$0xff]
    %v1944 = vld [vmem:[#allocation7 + $0x78] sm:$0xff]
    %v1945 = vld [vmem:[#allocation7 + $0x80] sm:$0xff]
    %v1946 = vld [vmem:[#allocation7 + $0x88] sm:$0xff]
    %v1947 = vld [vmem:[#allocation7 + $0x90] sm:$0xff]
    %v1948 = vld [vmem:[#allocation7 + $0x98] sm:$0xff]
    %v1949 = vld [vmem:[#allocation7 + $0xa0] sm:$0xff]
    %v1950 = vld [vmem:[#allocation7 + $0xa8] sm:$0xff]
    %v1951 = vld [vmem:[#allocation7 + $0xb0] sm:$0xff]
    %v1952 = vld [vmem:[#allocation7 + $0xb8] sm:$0xff]
    %v1953 = vld [vmem:[#allocation7 + $0xc0] sm:$0xff]
    %v1954 = vld [vmem:[#allocation7 + $0xc8] sm:$0xff]
    %v1955 = vld [vmem:[#allocation7 + $0xd0] sm:$0xff]
    %v1956 = vld [vmem:[#allocation7 + $0xd8] sm:$0xff]
    %v1957 = vld [vmem:[#allocation7 + $0xe0] sm:$0xff]
    %v1958 = vld [vmem:[#allocation7 + $0xe8] sm:$0xff]
    %v1959 = vld [vmem:[#allocation7 + $0xf0] sm:$0xff]
    %v1960 = vld [vmem:[#allocation7 + $0xf8] sm:$0xff]
    %v1993 = vunpack.c.l.b16 %v1929
    %v1994 = vunpack.c.h.b16 %v1929
    %v1995 = vunpack.c.l.b16 %v1930
    %v1996 = vunpack.c.h.b16 %v1930
    %v1997 = vunpack.c.l.b16 %v1931
    %v1998 = vunpack.c.h.b16 %v1931
    %v1999 = vunpack.c.l.b16 %v1932
    %v2000 = vunpack.c.h.b16 %v1932
    %v2001 = vunpack.c.l.b16 %v1933
    %v2002 = vunpack.c.h.b16 %v1933
    %v2003 = vunpack.c.l.b16 %v1934
    %v2004 = vunpack.c.h.b16 %v1934
    %v2005 = vunpack.c.l.b16 %v1935
    %v2006 = vunpack.c.h.b16 %v1935
    %v2007 = vunpack.c.l.b16 %v1936
    %v2008 = vunpack.c.h.b16 %v1936
    %v2009 = vunpack.c.l.b16 %v1937
    %v2010 = vunpack.c.h.b16 %v1937
    %v2011 = vunpack.c.l.b16 %v1938
    %v2012 = vunpack.c.h.b16 %v1938
    %v2013 = vunpack.c.l.b16 %v1939
    %v2014 = vunpack.c.h.b16 %v1939
    %v2015 = vunpack.c.l.b16 %v1940
    %v2016 = vunpack.c.h.b16 %v1940
    %v2017 = vunpack.c.l.b16 %v1941
    %v2018 = vunpack.c.h.b16 %v1941
    %v2019 = vunpack.c.l.b16 %v1942
    %v2020 = vunpack.c.h.b16 %v1942
    %v2021 = vunpack.c.l.b16 %v1943
    %v2022 = vunpack.c.h.b16 %v1943
    %v2023 = vunpack.c.l.b16 %v1944
    %v2024 = vunpack.c.h.b16 %v1944
    %v2025 = vunpack.c.l.b16 %v1945
    %v2026 = vunpack.c.h.b16 %v1945
    %v2027 = vunpack.c.l.b16 %v1946
    %v2028 = vunpack.c.h.b16 %v1946
    %v2029 = vunpack.c.l.b16 %v1947
    %v2030 = vunpack.c.h.b16 %v1947
    %v2031 = vunpack.c.l.b16 %v1948
    %v2032 = vunpack.c.h.b16 %v1948
    %v2033 = vunpack.c.l.b16 %v1949
    %v2034 = vunpack.c.h.b16 %v1949
    %v2035 = vunpack.c.l.b16 %v1950
    %v2036 = vunpack.c.h.b16 %v1950
    %v2037 = vunpack.c.l.b16 %v1951
    %v2038 = vunpack.c.h.b16 %v1951
    %v2039 = vunpack.c.l.b16 %v1952
    %v2040 = vunpack.c.h.b16 %v1952
    %v2041 = vunpack.c.l.b16 %v1953
    %v2042 = vunpack.c.h.b16 %v1953
    %v2043 = vunpack.c.l.b16 %v1954
    %v2044 = vunpack.c.h.b16 %v1954
    %v2045 = vunpack.c.l.b16 %v1955
    %v2046 = vunpack.c.h.b16 %v1955
    %v2047 = vunpack.c.l.b16 %v1956
    %v2048 = vunpack.c.h.b16 %v1956
    %v2049 = vunpack.c.l.b16 %v1957
    %v2050 = vunpack.c.h.b16 %v1957
    %v2051 = vunpack.c.l.b16 %v1958
    %v2052 = vunpack.c.h.b16 %v1958
    %v2053 = vunpack.c.l.b16 %v1959
    %v2054 = vunpack.c.h.b16 %v1959
    %v2055 = vunpack.c.l.b16 %v1960
    %v2056 = vunpack.c.h.b16 %v1960
    %v2057 = vpack.c.b16 %v1997, %v1993
    %v2058 = vpack.c.b16 %v1998, %v1994
    %v2059 = vpack.c.b16 %v1999, %v1995
    %v2060 = vpack.c.b16 %v2000, %v1996
    %v2061 = vpack.c.b16 %v2005, %v2001
    %v2062 = vpack.c.b16 %v2006, %v2002
    %v2063 = vpack.c.b16 %v2007, %v2003
    %v2064 = vpack.c.b16 %v2008, %v2004
    %v2065 = vpack.c.b16 %v2013, %v2009
    %v2066 = vpack.c.b16 %v2014, %v2010
    %v2067 = vpack.c.b16 %v2015, %v2011
    %v2068 = vpack.c.b16 %v2016, %v2012
    %v2069 = vpack.c.b16 %v2021, %v2017
    %v2070 = vpack.c.b16 %v2022, %v2018
    %v2071 = vpack.c.b16 %v2023, %v2019
    %v2072 = vpack.c.b16 %v2024, %v2020
    %v2073 = vpack.c.b16 %v2029, %v2025
    %v2074 = vpack.c.b16 %v2030, %v2026
    %v2075 = vpack.c.b16 %v2031, %v2027
    %v2076 = vpack.c.b16 %v2032, %v2028
    %v2077 = vpack.c.b16 %v2037, %v2033
    %v2078 = vpack.c.b16 %v2038, %v2034
    %v2079 = vpack.c.b16 %v2039, %v2035
    %v2080 = vpack.c.b16 %v2040, %v2036
    %v2081 = vpack.c.b16 %v2045, %v2041
    %v2082 = vpack.c.b16 %v2046, %v2042
    %v2083 = vpack.c.b16 %v2047, %v2043
    %v2084 = vpack.c.b16 %v2048, %v2044
    %v2085 = vpack.c.b16 %v2053, %v2049
    %v2086 = vpack.c.b16 %v2054, %v2050
    %v2087 = vpack.c.b16 %v2055, %v2051
    %v2088 = vpack.c.b16 %v2056, %v2052
    %2121 = vmatprep.subr.bf16.mxu0 %v2086
    %2122 = vmatpush1.bf16.msra.mxu0 %v2085
    %2123 = vmatprep.subr.bf16.mxu0 %v2082
    %2124 = vmatpush1.bf16.msra.mxu0 %v2081
    %2125 = vmatprep.subr.bf16.mxu0 %v2078
    %2126 = vmatpush1.bf16.msra.mxu0 %v2077
    %2127 = vmatprep.subr.bf16.mxu0 %v2074
    %2128 = vmatpush1.bf16.msra.mxu0 %v2073
    %2129 = vmatprep.subr.bf16.mxu0 %v2070
    %2130 = vmatpush1.bf16.msra.mxu0 %v2069
    %2131 = vmatprep.subr.bf16.mxu0 %v2066
    %2132 = vmatpush1.bf16.msra.mxu0 %v2065
    %2133 = vmatprep.subr.bf16.mxu0 %v2062
    %2134 = vmatpush1.bf16.msra.mxu0 %v2061
    %2135 = vmatprep.subr.bf16.mxu0 %v2058
    %2136 = vmatpush1.bf16.msra.mxu0 %v2057
    %2137 = vmatprep.subr.bf16.mxu0 0
    %2138 = vmatpush2.bf16.msra.mxu0 0
    %2139 = vmatprep.subr.bf16.mxu0 0
    %2140 = vmatpush2.bf16.msra.mxu0 0
    %2141 = vmatprep.subr.bf16.mxu0 0
    %2142 = vmatpush2.bf16.msra.mxu0 0
    %2143 = vmatprep.subr.bf16.mxu0 0
    %2144 = vmatpush2.bf16.msra.mxu0 0
    %2145 = vmatprep.subr.bf16.mxu0 0
    %2146 = vmatpush2.bf16.msra.mxu0 0
    %2147 = vmatprep.subr.bf16.mxu0 0
    %2148 = vmatpush2.bf16.msra.mxu0 0
    %2149 = vmatprep.subr.bf16.mxu0 0
    %2150 = vmatpush2.bf16.msra.mxu0 0
    %2151 = vmatprep.subr.bf16.mxu0 0
    %2152 = vmatpush2.bf16.msra.mxu0 0
    %2153 = vmatprep.mubr.bf16.mxu0 0
    %2154 = vmatmul.mubr.bf16.gmra.mxu0 %v1928
    %v2155 = vpop.f32.mrf.mxu0
    %v2156 = vadd.f32 0.0, %v2155
    %v2157 = vpop.f32.mrf.mxu0
    %v2158 = vadd.f32 0.0, %v2157
    %v2159 = vpop.f32.mrf.mxu0
    %v2160 = vpop.f32.mrf.mxu0
    %2161 = vdwg.mxu0
    %2162 = vmatprep.subr.bf16.mxu0 %v2088
    %2163 = vmatpush1.bf16.msra.mxu0 %v2087
    %2164 = vmatprep.subr.bf16.mxu0 %v2084
    %2165 = vmatpush1.bf16.msra.mxu0 %v2083
    %2166 = vmatprep.subr.bf16.mxu0 %v2080
    %2167 = vmatpush1.bf16.msra.mxu0 %v2079
    %2168 = vmatprep.subr.bf16.mxu0 %v2076
    %2169 = vmatpush1.bf16.msra.mxu0 %v2075
    %2170 = vmatprep.subr.bf16.mxu0 %v2072
    %2171 = vmatpush1.bf16.msra.mxu0 %v2071
    %2172 = vmatprep.subr.bf16.mxu0 %v2068
    %2173 = vmatpush1.bf16.msra.mxu0 %v2067
    %2174 = vmatprep.subr.bf16.mxu0 %v2064
    %2175 = vmatpush1.bf16.msra.mxu0 %v2063
    %2176 = vmatprep.subr.bf16.mxu0 %v2060
    %2177 = vmatpush1.bf16.msra.mxu0 %v2059
    %2178 = vmatprep.subr.bf16.mxu0 0
    %2179 = vmatpush2.bf16.msra.mxu0 0
    %2180 = vmatprep.subr.bf16.mxu0 0
    %2181 = vmatpush2.bf16.msra.mxu0 0
    %2182 = vmatprep.subr.bf16.mxu0 0
    %2183 = vmatpush2.bf16.msra.mxu0 0
    %2184 = vmatprep.subr.bf16.mxu0 0
    %2185 = vmatpush2.bf16.msra.mxu0 0
    %2186 = vmatprep.subr.bf16.mxu0 0
    %2187 = vmatpush2.bf16.msra.mxu0 0
    %2188 = vmatprep.subr.bf16.mxu0 0
    %2189 = vmatpush2.bf16.msra.mxu0 0
    %2190 = vmatprep.subr.bf16.mxu0 0
    %2191 = vmatpush2.bf16.msra.mxu0 0
    %2192 = vmatprep.subr.bf16.mxu0 0
    %2193 = vmatpush2.bf16.msra.mxu0 0
    %2194 = vmatprep.mubr.bf16.mxu0 0
    %2195 = vmatmul.mubr.bf16.gmra.mxu0 %v1928
    %v2196 = vpop.f32.mrf.mxu0
    %v2197 = vadd.f32 0.0, %v2196
    %v2198 = vpop.f32.mrf.mxu0
    %v2199 = vadd.f32 0.0, %v2198
    %v2200 = vpop.f32.mrf.mxu0
    %v2201 = vpop.f32.mrf.mxu0
    %2202 = vdwg.mxu0
    %s2203 = scalar_lea.vmem [#allocation4], 96
    %v2204 = vld [vmem:[%s2203] sm:$0xff]
    %v2205 = vld [vmem:[%s2203 + $0x8] sm:$0xff]
    %v2206 = vunpack.c.l.bf16 %v2204
    %v2207 = vunpack.c.h.bf16 %v2204
    %v2208 = vunpack.c.l.bf16 %v2205
    %v2209 = vunpack.c.h.bf16 %v2205
    %v2210 = vadd.f32 %v2206, %v2156
    %v2211 = vadd.f32 %v2207, %v2158
    %v2212 = vadd.f32 %v2208, %v2197
    %v2213 = vadd.f32 %v2209, %v2199
    %v2214 = vmul.f32 %v2210, 0.5
    %v2215 = vtanh.pop %v2214
    %v2216 = vadd.f32 %v2215, 1.0
    %v2217 = vmul.f32 %v2216, 0.5
    %v2218 = vmul.f32 %v2211, 0.5
    %v2219 = vtanh.pop %v2218
    %v2220 = vadd.f32 %v2219, 1.0
    %v2221 = vmul.f32 %v2220, 0.5
    %v2222 = vtanh.pop %v2212
    %v2223 = vmul.f32 %v2213, 0.5
    %v2224 = vtanh.pop %v2223
    %v2225 = vadd.f32 %v2224, 1.0
    %v2226 = vmul.f32 %v2225, 0.5
    %v2227 = vmul.f32 %v2221, %v1925
    %v2228 = vmul.f32 %v2217, %v2222
    %v2229 = vadd.f32 %v2227, %v2228
    %v2230 = vtanh.pop %v2229
    %v2231 = vmul.f32 %v2226, %v2230
    %s2232 = sadd.s32 %s355, 6
    %p2233 = scmp.lt.s32.totalorder %s2232, 8
    %s2234 = scalar_select %p2233, 1, 0
    %v2235 = vstv %s2234
    %vm2236 = vcmp.eq.s32.totalorder %v2235, 1
    %v2237 = vsel %vm2236, %v2231, %v1924
    %v2238 = vsel %vm2236, %v2229, %v1925
    %s2239 = scalar_lea.vmem [#allocation9], 48
    %2240 = vst [vmem:[%s2239] sm:$0xff] %v2237
    %v2241 = vpack.c.bf16 %v2237, %v2237
    %v2242 = vld [vmem:[#allocation7] sm:$0xff]
    %v2243 = vld [vmem:[#allocation7 + $0x8] sm:$0xff]
    %v2244 = vld [vmem:[#allocation7 + $0x10] sm:$0xff]
    %v2245 = vld [vmem:[#allocation7 + $0x18] sm:$0xff]
    %v2246 = vld [vmem:[#allocation7 + $0x20] sm:$0xff]
    %v2247 = vld [vmem:[#allocation7 + $0x28] sm:$0xff]
    %v2248 = vld [vmem:[#allocation7 + $0x30] sm:$0xff]
    %v2249 = vld [vmem:[#allocation7 + $0x38] sm:$0xff]
    %v2250 = vld [vmem:[#allocation7 + $0x40] sm:$0xff]
    %v2251 = vld [vmem:[#allocation7 + $0x48] sm:$0xff]
    %v2252 = vld [vmem:[#allocation7 + $0x50] sm:$0xff]
    %v2253 = vld [vmem:[#allocation7 + $0x58] sm:$0xff]
    %v2254 = vld [vmem:[#allocation7 + $0x60] sm:$0xff]
    %v2255 = vld [vmem:[#allocation7 + $0x68] sm:$0xff]
    %v2256 = vld [vmem:[#allocation7 + $0x70] sm:$0xff]
    %v2257 = vld [vmem:[#allocation7 + $0x78] sm:$0xff]
    %v2258 = vld [vmem:[#allocation7 + $0x80] sm:$0xff]
    %v2259 = vld [vmem:[#allocation7 + $0x88] sm:$0xff]
    %v2260 = vld [vmem:[#allocation7 + $0x90] sm:$0xff]
    %v2261 = vld [vmem:[#allocation7 + $0x98] sm:$0xff]
    %v2262 = vld [vmem:[#allocation7 + $0xa0] sm:$0xff]
    %v2263 = vld [vmem:[#allocation7 + $0xa8] sm:$0xff]
    %v2264 = vld [vmem:[#allocation7 + $0xb0] sm:$0xff]
    %v2265 = vld [vmem:[#allocation7 + $0xb8] sm:$0xff]
    %v2266 = vld [vmem:[#allocation7 + $0xc0] sm:$0xff]
    %v2267 = vld [vmem:[#allocation7 + $0xc8] sm:$0xff]
    %v2268 = vld [vmem:[#allocation7 + $0xd0] sm:$0xff]
    %v2269 = vld [vmem:[#allocation7 + $0xd8] sm:$0xff]
    %v2270 = vld [vmem:[#allocation7 + $0xe0] sm:$0xff]
    %v2271 = vld [vmem:[#allocation7 + $0xe8] sm:$0xff]
    %v2272 = vld [vmem:[#allocation7 + $0xf0] sm:$0xff]
    %v2273 = vld [vmem:[#allocation7 + $0xf8] sm:$0xff]
    %v2306 = vunpack.c.l.b16 %v2242
    %v2307 = vunpack.c.h.b16 %v2242
    %v2308 = vunpack.c.l.b16 %v2243
    %v2309 = vunpack.c.h.b16 %v2243
    %v2310 = vunpack.c.l.b16 %v2244
    %v2311 = vunpack.c.h.b16 %v2244
    %v2312 = vunpack.c.l.b16 %v2245
    %v2313 = vunpack.c.h.b16 %v2245
    %v2314 = vunpack.c.l.b16 %v2246
    %v2315 = vunpack.c.h.b16 %v2246
    %v2316 = vunpack.c.l.b16 %v2247
    %v2317 = vunpack.c.h.b16 %v2247
    %v2318 = vunpack.c.l.b16 %v2248
    %v2319 = vunpack.c.h.b16 %v2248
    %v2320 = vunpack.c.l.b16 %v2249
    %v2321 = vunpack.c.h.b16 %v2249
    %v2322 = vunpack.c.l.b16 %v2250
    %v2323 = vunpack.c.h.b16 %v2250
    %v2324 = vunpack.c.l.b16 %v2251
    %v2325 = vunpack.c.h.b16 %v2251
    %v2326 = vunpack.c.l.b16 %v2252
    %v2327 = vunpack.c.h.b16 %v2252
    %v2328 = vunpack.c.l.b16 %v2253
    %v2329 = vunpack.c.h.b16 %v2253
    %v2330 = vunpack.c.l.b16 %v2254
    %v2331 = vunpack.c.h.b16 %v2254
    %v2332 = vunpack.c.l.b16 %v2255
    %v2333 = vunpack.c.h.b16 %v2255
    %v2334 = vunpack.c.l.b16 %v2256
    %v2335 = vunpack.c.h.b16 %v2256
    %v2336 = vunpack.c.l.b16 %v2257
    %v2337 = vunpack.c.h.b16 %v2257
    %v2338 = vunpack.c.l.b16 %v2258
    %v2339 = vunpack.c.h.b16 %v2258
    %v2340 = vunpack.c.l.b16 %v2259
    %v2341 = vunpack.c.h.b16 %v2259
    %v2342 = vunpack.c.l.b16 %v2260
    %v2343 = vunpack.c.h.b16 %v2260
    %v2344 = vunpack.c.l.b16 %v2261
    %v2345 = vunpack.c.h.b16 %v2261
    %v2346 = vunpack.c.l.b16 %v2262
    %v2347 = vunpack.c.h.b16 %v2262
    %v2348 = vunpack.c.l.b16 %v2263
    %v2349 = vunpack.c.h.b16 %v2263
    %v2350 = vunpack.c.l.b16 %v2264
    %v2351 = vunpack.c.h.b16 %v2264
    %v2352 = vunpack.c.l.b16 %v2265
    %v2353 = vunpack.c.h.b16 %v2265
    %v2354 = vunpack.c.l.b16 %v2266
    %v2355 = vunpack.c.h.b16 %v2266
    %v2356 = vunpack.c.l.b16 %v2267
    %v2357 = vunpack.c.h.b16 %v2267
    %v2358 = vunpack.c.l.b16 %v2268
    %v2359 = vunpack.c.h.b16 %v2268
    %v2360 = vunpack.c.l.b16 %v2269
    %v2361 = vunpack.c.h.b16 %v2269
    %v2362 = vunpack.c.l.b16 %v2270
    %v2363 = vunpack.c.h.b16 %v2270
    %v2364 = vunpack.c.l.b16 %v2271
    %v2365 = vunpack.c.h.b16 %v2271
    %v2366 = vunpack.c.l.b16 %v2272
    %v2367 = vunpack.c.h.b16 %v2272
    %v2368 = vunpack.c.l.b16 %v2273
    %v2369 = vunpack.c.h.b16 %v2273
    %v2370 = vpack.c.b16 %v2310, %v2306
    %v2371 = vpack.c.b16 %v2311, %v2307
    %v2372 = vpack.c.b16 %v2312, %v2308
    %v2373 = vpack.c.b16 %v2313, %v2309
    %v2374 = vpack.c.b16 %v2318, %v2314
    %v2375 = vpack.c.b16 %v2319, %v2315
    %v2376 = vpack.c.b16 %v2320, %v2316
    %v2377 = vpack.c.b16 %v2321, %v2317
    %v2378 = vpack.c.b16 %v2326, %v2322
    %v2379 = vpack.c.b16 %v2327, %v2323
    %v2380 = vpack.c.b16 %v2328, %v2324
    %v2381 = vpack.c.b16 %v2329, %v2325
    %v2382 = vpack.c.b16 %v2334, %v2330
    %v2383 = vpack.c.b16 %v2335, %v2331
    %v2384 = vpack.c.b16 %v2336, %v2332
    %v2385 = vpack.c.b16 %v2337, %v2333
    %v2386 = vpack.c.b16 %v2342, %v2338
    %v2387 = vpack.c.b16 %v2343, %v2339
    %v2388 = vpack.c.b16 %v2344, %v2340
    %v2389 = vpack.c.b16 %v2345, %v2341
    %v2390 = vpack.c.b16 %v2350, %v2346
    %v2391 = vpack.c.b16 %v2351, %v2347
    %v2392 = vpack.c.b16 %v2352, %v2348
    %v2393 = vpack.c.b16 %v2353, %v2349
    %v2394 = vpack.c.b16 %v2358, %v2354
    %v2395 = vpack.c.b16 %v2359, %v2355
    %v2396 = vpack.c.b16 %v2360, %v2356
    %v2397 = vpack.c.b16 %v2361, %v2357
    %v2398 = vpack.c.b16 %v2366, %v2362
    %v2399 = vpack.c.b16 %v2367, %v2363
    %v2400 = vpack.c.b16 %v2368, %v2364
    %v2401 = vpack.c.b16 %v2369, %v2365
    %2434 = vmatprep.subr.bf16.mxu0 %v2399
    %2435 = vmatpush1.bf16.msra.mxu0 %v2398
    %2436 = vmatprep.subr.bf16.mxu0 %v2395
    %2437 = vmatpush1.bf16.msra.mxu0 %v2394
    %2438 = vmatprep.subr.bf16.mxu0 %v2391
    %2439 = vmatpush1.bf16.msra.mxu0 %v2390
    %2440 = vmatprep.subr.bf16.mxu0 %v2387
    %2441 = vmatpush1.bf16.msra.mxu0 %v2386
    %2442 = vmatprep.subr.bf16.mxu0 %v2383
    %2443 = vmatpush1.bf16.msra.mxu0 %v2382
    %2444 = vmatprep.subr.bf16.mxu0 %v2379
    %2445 = vmatpush1.bf16.msra.mxu0 %v2378
    %2446 = vmatprep.subr.bf16.mxu0 %v2375
    %2447 = vmatpush1.bf16.msra.mxu0 %v2374
    %2448 = vmatprep.subr.bf16.mxu0 %v2371
    %2449 = vmatpush1.bf16.msra.mxu0 %v2370
    %2450 = vmatprep.subr.bf16.mxu0 0
    %2451 = vmatpush2.bf16.msra.mxu0 0
    %2452 = vmatprep.subr.bf16.mxu0 0
    %2453 = vmatpush2.bf16.msra.mxu0 0
    %2454 = vmatprep.subr.bf16.mxu0 0
    %2455 = vmatpush2.bf16.msra.mxu0 0
    %2456 = vmatprep.subr.bf16.mxu0 0
    %2457 = vmatpush2.bf16.msra.mxu0 0
    %2458 = vmatprep.subr.bf16.mxu0 0
    %2459 = vmatpush2.bf16.msra.mxu0 0
    %2460 = vmatprep.subr.bf16.mxu0 0
    %2461 = vmatpush2.bf16.msra.mxu0 0
    %2462 = vmatprep.subr.bf16.mxu0 0
    %2463 = vmatpush2.bf16.msra.mxu0 0
    %2464 = vmatprep.subr.bf16.mxu0 0
    %2465 = vmatpush2.bf16.msra.mxu0 0
    %2466 = vmatprep.mubr.bf16.mxu0 0
    %2467 = vmatmul.mubr.bf16.gmra.mxu0 %v2241
    %v2468 = vpop.f32.mrf.mxu0
    %v2469 = vadd.f32 0.0, %v2468
    %v2470 = vpop.f32.mrf.mxu0
    %v2471 = vadd.f32 0.0, %v2470
    %v2472 = vpop.f32.mrf.mxu0
    %v2473 = vpop.f32.mrf.mxu0
    %2474 = vdwg.mxu0
    %2475 = vmatprep.subr.bf16.mxu0 %v2401
    %2476 = vmatpush1.bf16.msra.mxu0 %v2400
    %2477 = vmatprep.subr.bf16.mxu0 %v2397
    %2478 = vmatpush1.bf16.msra.mxu0 %v2396
    %2479 = vmatprep.subr.bf16.mxu0 %v2393
    %2480 = vmatpush1.bf16.msra.mxu0 %v2392
    %2481 = vmatprep.subr.bf16.mxu0 %v2389
    %2482 = vmatpush1.bf16.msra.mxu0 %v2388
    %2483 = vmatprep.subr.bf16.mxu0 %v2385
    %2484 = vmatpush1.bf16.msra.mxu0 %v2384
    %2485 = vmatprep.subr.bf16.mxu0 %v2381
    %2486 = vmatpush1.bf16.msra.mxu0 %v2380
    %2487 = vmatprep.subr.bf16.mxu0 %v2377
    %2488 = vmatpush1.bf16.msra.mxu0 %v2376
    %2489 = vmatprep.subr.bf16.mxu0 %v2373
    %2490 = vmatpush1.bf16.msra.mxu0 %v2372
    %2491 = vmatprep.subr.bf16.mxu0 0
    %2492 = vmatpush2.bf16.msra.mxu0 0
    %2493 = vmatprep.subr.bf16.mxu0 0
    %2494 = vmatpush2.bf16.msra.mxu0 0
    %2495 = vmatprep.subr.bf16.mxu0 0
    %2496 = vmatpush2.bf16.msra.mxu0 0
    %2497 = vmatprep.subr.bf16.mxu0 0
    %2498 = vmatpush2.bf16.msra.mxu0 0
    %2499 = vmatprep.subr.bf16.mxu0 0
    %2500 = vmatpush2.bf16.msra.mxu0 0
    %2501 = vmatprep.subr.bf16.mxu0 0
    %2502 = vmatpush2.bf16.msra.mxu0 0
    %2503 = vmatprep.subr.bf16.mxu0 0
    %2504 = vmatpush2.bf16.msra.mxu0 0
    %2505 = vmatprep.subr.bf16.mxu0 0
    %2506 = vmatpush2.bf16.msra.mxu0 0
    %2507 = vmatprep.mubr.bf16.mxu0 0
    %2508 = vmatmul.mubr.bf16.gmra.mxu0 %v2241
    %v2509 = vpop.f32.mrf.mxu0
    %v2510 = vadd.f32 0.0, %v2509
    %v2511 = vpop.f32.mrf.mxu0
    %v2512 = vadd.f32 0.0, %v2511
    %v2513 = vpop.f32.mrf.mxu0
    %v2514 = vpop.f32.mrf.mxu0
    %2515 = vdwg.mxu0
    %s2516 = scalar_lea.vmem [#allocation4], 112
    %v2517 = vld [vmem:[%s2516] sm:$0xff]
    %v2518 = vld [vmem:[%s2516 + $0x8] sm:$0xff]
    %v2519 = vunpack.c.l.bf16 %v2517
    %v2520 = vunpack.c.h.bf16 %v2517
    %v2521 = vunpack.c.l.bf16 %v2518
    %v2522 = vunpack.c.h.bf16 %v2518
    %v2523 = vadd.f32 %v2519, %v2469
    %v2524 = vadd.f32 %v2520, %v2471
    %v2525 = vadd.f32 %v2521, %v2510
    %v2526 = vadd.f32 %v2522, %v2512
    %v2527 = vmul.f32 %v2523, 0.5
    %v2528 = vtanh.pop %v2527
    %v2529 = vadd.f32 %v2528, 1.0
    %v2530 = vmul.f32 %v2529, 0.5
    %v2531 = vmul.f32 %v2524, 0.5
    %v2532 = vtanh.pop %v2531
    %v2533 = vadd.f32 %v2532, 1.0
    %v2534 = vmul.f32 %v2533, 0.5
    %v2535 = vtanh.pop %v2525
    %v2536 = vmul.f32 %v2526, 0.5
    %v2537 = vtanh.pop %v2536
    %v2538 = vadd.f32 %v2537, 1.0
    %v2539 = vmul.f32 %v2538, 0.5
    %v2540 = vmul.f32 %v2534, %v2238
    %v2541 = vmul.f32 %v2530, %v2535
    %v2542 = vadd.f32 %v2540, %v2541
    %v2543 = vtanh.pop %v2542
    %v2544 = vmul.f32 %v2539, %v2543
    %s2545 = sadd.s32 %s355, 7
    %p2546 = scmp.lt.s32.totalorder %s2545, 8
    %s2547 = scalar_select %p2546, 1, 0
    %v2548 = vstv %s2547
    %vm2549 = vcmp.eq.s32.totalorder %v2548, 1
    %v2550 = vsel %vm2549, %v2544, %v2237
    %v2551 = vsel %vm2549, %v2542, %v2238
    %s2552 = scalar_lea.vmem [#allocation9], 56
    %2553 = vst [vmem:[%s2552] sm:$0xff] %v2550
    %2554 = vst [vmem:[#allocation2] sm:$0xff] %v2550
    %2555 = vst [vmem:[#allocation3] sm:$0xff] %v2551
    %2556 = vst [vmem:[#allocation10] sm:$0xff] %v2551
    // Predicated region
    $region22: #{tpu_custom_call.1} parent=1 // pred_check
      _
    $region23: #{tpu_custom_call.1} parent=1 // pred_check_branch
      %2558 = sbr.rel (0) target = $region25
    $region24: #{tpu_custom_call.1} parent=1 // pred_region
      %s2560 = ssub.s32 1024, 1024
      %2561 = vsyncadd [#allocation6], %s2560
      %s2562 = sshll.u32 [#allocation9], 4
      %s2563 = int_to_ptr.vmem [resolvable:$true] %s2562
      %2568 = dma.vmem_to_hbm [thread:$0]  %s2563, 1024, %s2, [#allocation6], 128, 128, 8
    $region25: #{tpu_custom_call.1} parent=1 // pred_fallthru
      _
    // Predicated region
    $region26: #{tpu_custom_call.1} parent=1 // pred_check
      _
    $region27: #{tpu_custom_call.1} parent=1 // pred_check_branch
      %2570 = sbr.rel (0) target = $region29
    $region28: #{tpu_custom_call.1} parent=1 // pred_region
      %s2572 = ssub.s32 128, 128
      %2573 = vsyncadd [#allocation11], %s2572
      %s2575 = sshll.u32 [#allocation10], 4
      %s2576 = int_to_ptr.vmem [resolvable:$true] %s2575
      %2578 = dma.vmem_to_hbm [thread:$0]  %s2576, 128, %s3, [#allocation11]
    $region29: #{tpu_custom_call.1} parent=1 // pred_fallthru
      _
    // Predicated region
    $region30: #{tpu_custom_call.1} parent=1 // pred_check
      _
    $region31: #{tpu_custom_call.1} parent=1 // pred_check_branch
      %2580 = sbr.rel (0) target = $region33
    $region32: #{tpu_custom_call.1} parent=1 // pred_region
      %2581 = dma.done [#allocation6], 1024
    $region33: #{tpu_custom_call.1} parent=1 // pred_fallthru
      _
    // Predicated region
    $region34: #{tpu_custom_call.1} parent=1 // pred_check
      _
    $region35: #{tpu_custom_call.1} parent=1 // pred_check_branch
      %2583 = sbr.rel (0) target = $region37
    $region36: #{tpu_custom_call.1} parent=1 // pred_region
      %2584 = dma.done [#allocation11], 128
    $region37: #{tpu_custom_call.1} parent=1 // pred_fallthru
      _
    %2585 = vsyncpa [#allocation5], 1
    %2586 = vsyncpa [#allocation8], 1
    %2587 = vsyncpa [#allocation6], 1
    %2588 = vsyncpa [#allocation11], 1

</llo_original>
